<compile_context>
chip_gen: v6e
topology: v6e:2x2x1
jax: 0.10.0
libtpu: 0.0.40
codegen_flags: <defaults>
</compile_context>

<pallas_src>
import re

import jax
import jax.numpy as jnp
from jax.experimental import pallas as pl
from jax.experimental.pallas import tpu as pltpu


NEG_SLOPE = 0.01      # nn.LeakyReLU() default negative_slope
SUBLANE = 8           # TPU sublane width


def _round_up(n, m):
    return ((n + m - 1) // m) * m


def _cdiv(a, b):
    return -(-a // b)


def _leaky_relu(v):
    # mul + max (2 VPU ops) instead of cmp+mul+select; identical for slope < 1.
    return jnp.maximum(v, NEG_SLOPE * v)


def _tpu_generation():
    """Best-effort TPU generation from the device kind (e.g. 'TPU v6e' -> 6)."""
    try:
        kind = jax.devices()[0].device_kind.lower()
    except Exception:
        return None
    if "tpu" not in kind:
        return None
    m = re.search(r"(\d+)", kind)
    return int(m.group(1)) if m else None


def _vmem_capacity_bytes():
    try:
        return int(pltpu.get_tpu_info().vmem_capacity_bytes)
    except Exception:
        gen = _tpu_generation()
        return (64 << 20) if (gen is not None and gen >= 7) else (128 << 20)


# --------------------------------------------------------------------------
# Kernel
# --------------------------------------------------------------------------
def fnn_kernel(x_ref,
               w1_ref, b1_ref,
               w2_ref, b2_ref,
               w3_ref, b3_ref,
               w4_ref, b4_ref,
               o_ref):
    """All four Linear + LeakyReLU layers fused; weights are VMEM-resident,
    x/out tiles are pipelined over the batch grid axis."""
    cdt = w1_ref.dtype                      # matmul-input (compute) dtype
    h = x_ref[...]
    if h.dtype != cdt:
        h = h.astype(cdt)
    a = None
    for w_ref, b_ref in ((w1_ref, b1_ref), (w2_ref, b2_ref),
                         (w3_ref, b3_ref), (w4_ref, b4_ref)):
        # MXU matmul with f32 accumulation; epilogue in the bias dtype
        # (bf16 on v6e/v7x, f32 on v5e / f32 compute path).
        acc = jnp.dot(h, w_ref[...], preferred_element_type=jnp.float32)
        a = _leaky_relu(acc.astype(b_ref.dtype) + b_ref[...])
        h = a if a.dtype == cdt else a.astype(cdt)
    o_ref[...] = a.astype(o_ref.dtype)


# --------------------------------------------------------------------------
# One-time weight preparation (hoisted out of the forward path)
# --------------------------------------------------------------------------
def prepare_params(params, compute_dtype=jnp.bfloat16, *,
                   feature_align=None, epilogue_dtype=None):
    """PyTorch-layout weights [out, in] -> [in_pad, out_pad] (zero padded to
    the MXU-friendly alignment), cast to `compute_dtype`. Biases ->
    [1, out_pad] in the epilogue dtype. Zero padding is numerically exact:
    padded activations stay exactly 0 through every layer."""
    gen = _tpu_generation()
    if feature_align is None:
        # v6e/v7x MXUs are 2x256^2 -> 256 alignment; v5e (4x128^2) keeps 128.
        feature_align = 256 if (gen is not None and gen >= 6) else 128
    is_bf16 = jnp.dtype(compute_dtype) == jnp.dtype(jnp.bfloat16)
    if epilogue_dtype is None:
        epilogue_dtype = (jnp.bfloat16
                          if (is_bf16 and gen is not None and gen >= 6)
                          else jnp.float32)

    prepped = {}
    for i in (1, 2, 3, 4):
        w = params[f"w{i}"]                 # [out_features, in_features]
        b = params[f"b{i}"]                 # [out_features]
        fo, fi = w.shape
        fi_p = _round_up(fi, feature_align)
        fo_p = _round_up(fo, feature_align)
        wt = jnp.zeros((fi_p, fo_p), compute_dtype)
        wt = wt.at[:fi, :fo].set(jnp.transpose(w).astype(compute_dtype))
        bp = jnp.zeros((1, fo_p), epilogue_dtype)
        bp = bp.at[0, :fo].set(b.astype(epilogue_dtype))
        prepped[f"w{i}"] = wt
        prepped[f"b{i}"] = bp
    return prepped


def _pick_tile_b(B, in_p, out_p, feat_dims, cbytes, obytes,
                 weight_bytes, vmem_cap, gen):
    # Row cap: larger tiles on the 128 MiB parts, 512 on v7x's 64 MiB.
    cap_rows = 1024 if vmem_cap >= (100 << 20) else 512
    # Per-row VMEM: double-buffered x/out tiles + per-layer intermediates.
    per_row = (2 * (in_p * cbytes + out_p * obytes)
               + sum(feat_dims) * (8 + cbytes))
    budget = int(0.75 * vmem_cap) - 2 * weight_bytes   # 2x: worst-case buffering
    if budget > 0 and per_row > 0:
        fit_rows = (budget // per_row) // SUBLANE * SUBLANE
        if fit_rows >= SUBLANE:
            cap_rows = min(cap_rows, fit_rows)
    tile_b = min(cap_rows, _round_up(B, SUBLANE))
    tile_b = max(SUBLANE, _round_up(tile_b, SUBLANE))
    # v7x: make sure there are >=2 grid steps so both TensorCores engage.
    if (gen is not None and gen >= 7 and _cdiv(B, tile_b) < 2
            and B >= 2 * SUBLANE):
        tile_b = max(SUBLANE, _round_up(_cdiv(B, 2), SUBLANE))
    return tile_b


# --------------------------------------------------------------------------
# Forward wrapper
# --------------------------------------------------------------------------
def fnn_forward(x, prepped, out_dim, *, tile_b=None, out_dtype=None):
    """x: [batch, in_dim]; prepped: output of prepare_params; returns
    [batch, out_dim] in `out_dtype` (default: x.dtype)."""
    B, in_dim = x.shape
    cdt = prepped["w1"].dtype
    in_p = prepped["w1"].shape[0]
    out_p = prepped["w4"].shape[1]
    out_dtype = x.dtype if out_dtype is None else out_dtype

    cbytes = jnp.dtype(cdt).itemsize
    obytes = jnp.dtype(out_dtype).itemsize
    feat_dims = [prepped[f"w{k}"].shape[1] for k in (1, 2, 3, 4)]
    weight_bytes = 0
    for k in (1, 2, 3, 4):
        weight_bytes += prepped[f"w{k}"].size * cbytes
        weight_bytes += (prepped[f"b{k}"].size
                         * jnp.dtype(prepped[f"b{k}"].dtype).itemsize)

    vmem_cap = _vmem_capacity_bytes()
    gen = _tpu_generation()

    if tile_b is None:
        tile_b = _pick_tile_b(B, in_p, out_p, feat_dims, cbytes, obytes,
                              weight_bytes, vmem_cap, gen)
    else:
        tile_b = max(SUBLANE, _round_up(tile_b, SUBLANE))

    grid = (_cdiv(B, tile_b),)   # ragged last tile: garbage rows, discarded

    # Pre-cast x to the compute dtype and pad only the feature dim (single
    # small copy; no batch padding / no extra full pass over x).
    if x.dtype == cdt and in_dim == in_p:
        x_c = x
    elif in_dim == in_p:
        x_c = x.astype(cdt)
    else:
        x_c = jnp.zeros((B, in_p), cdt).at[:, :in_dim].set(x.astype(cdt))

    args = [x_c]
    for k in (1, 2, 3, 4):
        args += [prepped[f"w{k}"], prepped[f"b{k}"]]

    # VMEM limit: resident weights (double-counted, in case single-buffering
    # is unavailable) + activations + double-buffered x/out tiles, with
    # headroom, clamped below the physical per-TC VMEM of this generation.
    act_bytes = tile_b * sum(feat_dims) * (8 + cbytes)
    io_bytes = 2 * tile_b * (in_p * cbytes + out_p * obytes)
    vmem_est = 2 * weight_bytes + act_bytes + io_bytes
    cap_limit = int(0.9 * vmem_cap)
    vmem_limit = min(max(int(1.5 * vmem_est) + (2 << 20), 32 << 20), cap_limit)
    # TODO(synk): if vmem_est exceeds cap_limit, switch to the weight-streaming
    # path described at the top of the file instead of fully-resident weights.

    flops = 2 * B * sum(prepped[f"w{k}"].shape[0] * prepped[f"w{k}"].shape[1]
                        for k in (1, 2, 3, 4))
    bytes_accessed = weight_bytes + x_c.size * cbytes + B * out_p * obytes

    def _call(single_buffer_weights):
        in_specs = [pl.BlockSpec((tile_b, in_p), lambda i: (i, 0))]
        for k in (1, 2, 3, 4):
            w = prepped[f"w{k}"]
            b = prepped[f"b{k}"]
            if single_buffer_weights:
                # Constant index map + single buffer: weights stay resident,
                # counted once in VMEM, never re-DMA'd.
                in_specs += [
                    pl.BlockSpec(w.shape, lambda i: (0, 0),
                                 pipeline_mode=pl.Buffered(1)),
                    pl.BlockSpec(b.shape, lambda i: (0, 0),
                                 pipeline_mode=pl.Buffered(1)),
                ]
            else:
                in_specs += [pl.BlockSpec(w.shape, lambda i: (0, 0)),
                             pl.BlockSpec(b.shape, lambda i: (0, 0))]
        out_specs = pl.BlockSpec((tile_b, out_p), lambda i: (i, 0))
        return pl.pallas_call(
            fnn_kernel,
            out_shape=jax.ShapeDtypeStruct((B, out_p), out_dtype),
            grid=grid,
            in_specs=in_specs,
            out_specs=out_specs,
            compiler_params=pltpu.CompilerParams(
                dimension_semantics=("parallel",),   # megacore sharding (v7x)
                vmem_limit_bytes=int(vmem_limit)),
            cost_estimate=pl.CostEstimate(
                flops=flops, transcendentals=0, bytes_accessed=bytes_accessed),
        )(*args)

    try:
        y = jax.block_until_ready(_call(True))
    except Exception:
        # Fallback if this JAX/Mosaic build rejects pipeline_mode=Buffered(1).
        y = _call(False)

    return y[:, :out_dim]


# --------------------------------------------------------------------------
# Reference / init / test harness
# --------------------------------------------------------------------------
def init_params(key, in_dim, out_dim, hidden_dim, dtype=jnp.float32):
    """Deterministic synthetic init matching nn.Linear shapes (weight: [out, in])."""
    dims = [
        (hidden_dim, in_dim),          # linear_1
        (hidden_dim * 2, hidden_dim),  # linear_2
        (hidden_dim, hidden_dim * 2),  # linear_3
        (out_dim, hidden_dim),         # linear_4
    ]
    params = {}
    for i, (fo, fi) in enumerate(dims, start=1):
        key, kw, kb = jax.random.split(key, 3)
        bound = 1.0 / jnp.sqrt(fi)
        params[f"w{i}"] = jax.random.uniform(kw, (fo, fi), dtype, -bound, bound)
        params[f"b{i}"] = jax.random.uniform(kb, (fo,), dtype, -bound, bound)
    return params


def fnn_reference(x, params):
    """Pure-JAX f32 reference mirroring the PyTorch forward exactly."""
    h = x
    for i in (1, 2, 3, 4):
        h = h @ params[f"w{i}"].T + params[f"b{i}"]
        h = jnp.where(h >= 0, h, NEG_SLOPE * h)
    return h


if __name__ == "__main__":
    in_dim, out_dim, hidden_dim = 16, 8, 32
    batch = 12   # deliberately not a tile multiple -> exercises ragged last tile

    key = jax.random.PRNGKey(0)
    key, kx = jax.random.split(key)
    x = jax.random.normal(kx, (batch, in_dim), jnp.float32)
    params = init_params(key, in_dim, out_dim, hidden_dim)

    ref = fnn_reference(x, params)

    # f32 compute path: f32 weights, f32 epilogue — tight tolerance vs reference.
    prepped_f32 = prepare_params(params, compute_dtype=jnp.float32)
    out_f32 = jax.block_until_ready(fnn_forward(x, prepped_f32, out_dim))
    assert out_f32.shape == (batch, out_dim)
    assert jnp.allclose(out_f32, ref, atol=1e-4, rtol=1e-4), \
        "Pallas (f32) output mismatch vs reference"

    # bf16 compute path (default / fast): looser tolerance vs f32 reference.
    prepped_bf16 = prepare_params(params)   # bf16 weights; bf16 epilogue on v6e/v7x
    out_bf16 = jax.block_until_ready(fnn_forward(x, prepped_bf16, out_dim))
    assert out_bf16.shape == (batch, out_dim)
    assert jnp.allclose(out_bf16, ref, atol=5e-2, rtol=5e-2), \
        "Pallas (bf16) output mismatch vs reference"

    print("KERNEL_OK")
</pallas_src>

<mosaic_0001>
module attributes {stable_mosaic.version = 11 : i64} {
  func.func @fnn_kernel(%arg0: i32, %arg1: memref<16x128xf32, #tpu.memory_space<vmem>>, %arg2: memref<128x128xf32, #tpu.memory_space<vmem>>, %arg3: memref<1x128xf32, #tpu.memory_space<vmem>>, %arg4: memref<128x128xf32, #tpu.memory_space<vmem>>, %arg5: memref<1x128xf32, #tpu.memory_space<vmem>>, %arg6: memref<128x128xf32, #tpu.memory_space<vmem>>, %arg7: memref<1x128xf32, #tpu.memory_space<vmem>>, %arg8: memref<128x128xf32, #tpu.memory_space<vmem>>, %arg9: memref<1x128xf32, #tpu.memory_space<vmem>>, %arg10: memref<16x128xf32, #tpu.memory_space<vmem>>) attributes {dimension_semantics = [#tpu.dimension_semantics<parallel>], iteration_bounds = array<i64: 1>, scalar_prefetch = 0 : i64, scratch_operands = 0 : i64, tpu.core_type = #tpu.core_type<tc>, window_params = [{transform_indices = @transform_0, window_bounds = array<i64: 16, 128>}, {pipeline_mode = #tpu.pipeline_mode<synchronous>, transform_indices = @transform_1, window_bounds = array<i64: 128, 128>}, {pipeline_mode = #tpu.pipeline_mode<synchronous>, transform_indices = @transform_2, window_bounds = array<i64: 1, 128>}, {pipeline_mode = #tpu.pipeline_mode<synchronous>, transform_indices = @transform_3, window_bounds = array<i64: 128, 128>}, {pipeline_mode = #tpu.pipeline_mode<synchronous>, transform_indices = @transform_4, window_bounds = array<i64: 1, 128>}, {pipeline_mode = #tpu.pipeline_mode<synchronous>, transform_indices = @transform_5, window_bounds = array<i64: 128, 128>}, {pipeline_mode = #tpu.pipeline_mode<synchronous>, transform_indices = @transform_6, window_bounds = array<i64: 1, 128>}, {pipeline_mode = #tpu.pipeline_mode<synchronous>, transform_indices = @transform_7, window_bounds = array<i64: 128, 128>}, {pipeline_mode = #tpu.pipeline_mode<synchronous>, transform_indices = @transform_8, window_bounds = array<i64: 1, 128>}, {transform_indices = @transform_9, window_bounds = array<i64: 16, 128>}]} {
    %c0 = arith.constant 0 : index
    %c0_0 = arith.constant 0 : index
    %0 = vector.load %arg1[%c0, %c0_0] : memref<16x128xf32, #tpu.memory_space<vmem>>, vector<16x128xf32>
    %c0_1 = arith.constant 0 : index
    %c0_2 = arith.constant 0 : index
    %1 = vector.load %arg2[%c0_1, %c0_2] : memref<128x128xf32, #tpu.memory_space<vmem>>, vector<128x128xf32>
    %cst = arith.constant dense<0.000000e+00> : vector<16x128xf32>
    %2 = tpu.matmul %0, %1, %cst {dimension_numbers = #tpu.dot_dimension_numbers<[1], [0], [0], [1], [0, 0, 1, 1], [], []>} : vector<16x128xf32>, vector<128x128xf32>, vector<16x128xf32> -> vector<16x128xf32>
    %c0_3 = arith.constant 0 : index
    %c0_4 = arith.constant 0 : index
    %3 = vector.load %arg3[%c0_3, %c0_4] : memref<1x128xf32, #tpu.memory_space<vmem>>, vector<1x128xf32>
    %4 = vector.broadcast %3 : vector<1x128xf32> to vector<16x128xf32>
    %5 = arith.addf %2, %4 : vector<16x128xf32>
    %cst_5 = arith.constant 0.00999999977 : f32
    %6 = vector.broadcast %cst_5 : f32 to vector<16x128xf32>
    %7 = arith.mulf %6, %5 : vector<16x128xf32>
    %8 = arith.maximumf %5, %7 : vector<16x128xf32>
    %c0_6 = arith.constant 0 : index
    %c0_7 = arith.constant 0 : index
    %9 = vector.load %arg4[%c0_6, %c0_7] : memref<128x128xf32, #tpu.memory_space<vmem>>, vector<128x128xf32>
    %cst_8 = arith.constant dense<0.000000e+00> : vector<16x128xf32>
    %10 = tpu.matmul %8, %9, %cst_8 {dimension_numbers = #tpu.dot_dimension_numbers<[1], [0], [0], [1], [0, 0, 1, 1], [], []>} : vector<16x128xf32>, vector<128x128xf32>, vector<16x128xf32> -> vector<16x128xf32>
    %c0_9 = arith.constant 0 : index
    %c0_10 = arith.constant 0 : index
    %11 = vector.load %arg5[%c0_9, %c0_10] : memref<1x128xf32, #tpu.memory_space<vmem>>, vector<1x128xf32>
    %12 = vector.broadcast %11 : vector<1x128xf32> to vector<16x128xf32>
    %13 = arith.addf %10, %12 : vector<16x128xf32>
    %cst_11 = arith.constant 0.00999999977 : f32
    %14 = vector.broadcast %cst_11 : f32 to vector<16x128xf32>
    %15 = arith.mulf %14, %13 : vector<16x128xf32>
    %16 = arith.maximumf %13, %15 : vector<16x128xf32>
    %c0_12 = arith.constant 0 : index
    %c0_13 = arith.constant 0 : index
    %17 = vector.load %arg6[%c0_12, %c0_13] : memref<128x128xf32, #tpu.memory_space<vmem>>, vector<128x128xf32>
    %cst_14 = arith.constant dense<0.000000e+00> : vector<16x128xf32>
    %18 = tpu.matmul %16, %17, %cst_14 {dimension_numbers = #tpu.dot_dimension_numbers<[1], [0], [0], [1], [0, 0, 1, 1], [], []>} : vector<16x128xf32>, vector<128x128xf32>, vector<16x128xf32> -> vector<16x128xf32>
    %c0_15 = arith.constant 0 : index
    %c0_16 = arith.constant 0 : index
    %19 = vector.load %arg7[%c0_15, %c0_16] : memref<1x128xf32, #tpu.memory_space<vmem>>, vector<1x128xf32>
    %20 = vector.broadcast %19 : vector<1x128xf32> to vector<16x128xf32>
    %21 = arith.addf %18, %20 : vector<16x128xf32>
    %cst_17 = arith.constant 0.00999999977 : f32
    %22 = vector.broadcast %cst_17 : f32 to vector<16x128xf32>
    %23 = arith.mulf %22, %21 : vector<16x128xf32>
    %24 = arith.maximumf %21, %23 : vector<16x128xf32>
    %c0_18 = arith.constant 0 : index
    %c0_19 = arith.constant 0 : index
    %25 = vector.load %arg8[%c0_18, %c0_19] : memref<128x128xf32, #tpu.memory_space<vmem>>, vector<128x128xf32>
    %cst_20 = arith.constant dense<0.000000e+00> : vector<16x128xf32>
    %26 = tpu.matmul %24, %25, %cst_20 {dimension_numbers = #tpu.dot_dimension_numbers<[1], [0], [0], [1], [0, 0, 1, 1], [], []>} : vector<16x128xf32>, vector<128x128xf32>, vector<16x128xf32> -> vector<16x128xf32>
    %c0_21 = arith.constant 0 : index
    %c0_22 = arith.constant 0 : index
    %27 = vector.load %arg9[%c0_21, %c0_22] : memref<1x128xf32, #tpu.memory_space<vmem>>, vector<1x128xf32>
    %28 = vector.broadcast %27 : vector<1x128xf32> to vector<16x128xf32>
    %29 = arith.addf %26, %28 : vector<16x128xf32>
    %cst_23 = arith.constant 0.00999999977 : f32
    %30 = vector.broadcast %cst_23 : f32 to vector<16x128xf32>
    %31 = arith.mulf %30, %29 : vector<16x128xf32>
    %32 = arith.maximumf %29, %31 : vector<16x128xf32>
    %c0_24 = arith.constant 0 : index
    %c0_25 = arith.constant 0 : index
    %33 = vector.load %arg10[%c0_24, %c0_25] : memref<16x128xf32, #tpu.memory_space<vmem>>, vector<16x128xf32>
    tpu.vector_store %arg10[%c0_24, %c0_25], %32 {strides = array<i32>} : memref<16x128xf32, #tpu.memory_space<vmem>>, vector<16x128xf32>,
    return
  }
  func.func @transform_0(%arg0: i32) -> (i32, i32) {
    %c0_i32 = arith.constant 0 : i32
    %c0_i32_0 = arith.constant 0 : i32
    return %arg0, %c0_i32 : i32, i32
  }
  func.func @transform_1(%arg0: i32) -> (i32, i32) {
    %c0_i32 = arith.constant 0 : i32
    %c0_i32_0 = arith.constant 0 : i32
    %c0_i32_1 = arith.constant 0 : i32
    return %c0_i32, %c0_i32_0 : i32, i32
  }
  func.func @transform_2(%arg0: i32) -> (i32, i32) {
    %c0_i32 = arith.constant 0 : i32
    %c0_i32_0 = arith.constant 0 : i32
    %c0_i32_1 = arith.constant 0 : i32
    return %c0_i32, %c0_i32_0 : i32, i32
  }
  func.func @transform_3(%arg0: i32) -> (i32, i32) {
    %c0_i32 = arith.constant 0 : i32
    %c0_i32_0 = arith.constant 0 : i32
    %c0_i32_1 = arith.constant 0 : i32
    return %c0_i32, %c0_i32_0 : i32, i32
  }
  func.func @transform_4(%arg0: i32) -> (i32, i32) {
    %c0_i32 = arith.constant 0 : i32
    %c0_i32_0 = arith.constant 0 : i32
    %c0_i32_1 = arith.constant 0 : i32
    return %c0_i32, %c0_i32_0 : i32, i32
  }
  func.func @transform_5(%arg0: i32) -> (i32, i32) {
    %c0_i32 = arith.constant 0 : i32
    %c0_i32_0 = arith.constant 0 : i32
    %c0_i32_1 = arith.constant 0 : i32
    return %c0_i32, %c0_i32_0 : i32, i32
  }
  func.func @transform_6(%arg0: i32) -> (i32, i32) {
    %c0_i32 = arith.constant 0 : i32
    %c0_i32_0 = arith.constant 0 : i32
    %c0_i32_1 = arith.constant 0 : i32
    return %c0_i32, %c0_i32_0 : i32, i32
  }
  func.func @transform_7(%arg0: i32) -> (i32, i32) {
    %c0_i32 = arith.constant 0 : i32
    %c0_i32_0 = arith.constant 0 : i32
    %c0_i32_1 = arith.constant 0 : i32
    return %c0_i32, %c0_i32_0 : i32, i32
  }
  func.func @transform_8(%arg0: i32) -> (i32, i32) {
    %c0_i32 = arith.constant 0 : i32
    %c0_i32_0 = arith.constant 0 : i32
    %c0_i32_1 = arith.constant 0 : i32
    return %c0_i32, %c0_i32_0 : i32, i32
  }
  func.func @transform_9(%arg0: i32) -> (i32, i32) {
    %c0_i32 = arith.constant 0 : i32
    %c0_i32_0 = arith.constant 0 : i32
    return %arg0, %c0_i32 : i32, i32
  }
}

module attributes {stable_mosaic.version = 11 : i64} {
  func.func @fnn_kernel(%arg0: i32, %arg1: memref<16x128xf32, #tpu.memory_space<vmem>>, %arg2: memref<128x128xf32, #tpu.memory_space<vmem>>, %arg3: memref<1x128xf32, #tpu.memory_space<vmem>>, %arg4: memref<128x128xf32, #tpu.memory_space<vmem>>, %arg5: memref<1x128xf32, #tpu.memory_space<vmem>>, %arg6: memref<128x128xf32, #tpu.memory_space<vmem>>, %arg7: memref<1x128xf32, #tpu.memory_space<vmem>>, %arg8: memref<128x128xf32, #tpu.memory_space<vmem>>, %arg9: memref<1x128xf32, #tpu.memory_space<vmem>>, %arg10: memref<16x128xf32, #tpu.memory_space<vmem>>) attributes {dimension_semantics = [#tpu.dimension_semantics<parallel>], iteration_bounds = array<i64: 1>, scalar_prefetch = 0 : i64, scratch_operands = 0 : i64, tpu.core_type = #tpu.core_type<tc>, window_params = [{transform_indices = @transform_0, window_bounds = array<i64: 16, 128>}, {pipeline_mode = #tpu.pipeline_mode<synchronous>, transform_indices = @transform_1, window_bounds = array<i64: 128, 128>}, {pipeline_mode = #tpu.pipeline_mode<synchronous>, transform_indices = @transform_2, window_bounds = array<i64: 1, 128>}, {pipeline_mode = #tpu.pipeline_mode<synchronous>, transform_indices = @transform_3, window_bounds = array<i64: 128, 128>}, {pipeline_mode = #tpu.pipeline_mode<synchronous>, transform_indices = @transform_4, window_bounds = array<i64: 1, 128>}, {pipeline_mode = #tpu.pipeline_mode<synchronous>, transform_indices = @transform_5, window_bounds = array<i64: 128, 128>}, {pipeline_mode = #tpu.pipeline_mode<synchronous>, transform_indices = @transform_6, window_bounds = array<i64: 1, 128>}, {pipeline_mode = #tpu.pipeline_mode<synchronous>, transform_indices = @transform_7, window_bounds = array<i64: 128, 128>}, {pipeline_mode = #tpu.pipeline_mode<synchronous>, transform_indices = @transform_8, window_bounds = array<i64: 1, 128>}, {transform_indices = @transform_9, window_bounds = array<i64: 16, 128>}]} {
    %c0 = arith.constant 0 : index
    %c0_0 = arith.constant 0 : index
    %0 = vector.load %arg1[%c0, %c0_0] : memref<16x128xf32, #tpu.memory_space<vmem>>, vector<16x128xf32>
    %c0_1 = arith.constant 0 : index
    %c0_2 = arith.constant 0 : index
    %1 = vector.load %arg2[%c0_1, %c0_2] : memref<128x128xf32, #tpu.memory_space<vmem>>, vector<128x128xf32>
    %cst = arith.constant dense<0.000000e+00> : vector<16x128xf32>
    %2 = tpu.matmul %0, %1, %cst {dimension_numbers = #tpu.dot_dimension_numbers<[1], [0], [0], [1], [0, 0, 1, 1], [], []>} : vector<16x128xf32>, vector<128x128xf32>, vector<16x128xf32> -> vector<16x128xf32>
    %c0_3 = arith.constant 0 : index
    %c0_4 = arith.constant 0 : index
    %3 = vector.load %arg3[%c0_3, %c0_4] : memref<1x128xf32, #tpu.memory_space<vmem>>, vector<1x128xf32>
    %4 = vector.broadcast %3 : vector<1x128xf32> to vector<16x128xf32>
    %5 = arith.addf %2, %4 : vector<16x128xf32>
    %cst_5 = arith.constant 0.00999999977 : f32
    %6 = vector.broadcast %cst_5 : f32 to vector<16x128xf32>
    %7 = arith.mulf %6, %5 : vector<16x128xf32>
    %8 = arith.maximumf %5, %7 : vector<16x128xf32>
    %c0_6 = arith.constant 0 : index
    %c0_7 = arith.constant 0 : index
    %9 = vector.load %arg4[%c0_6, %c0_7] : memref<128x128xf32, #tpu.memory_space<vmem>>, vector<128x128xf32>
    %cst_8 = arith.constant dense<0.000000e+00> : vector<16x128xf32>
    %10 = tpu.matmul %8, %9, %cst_8 {dimension_numbers = #tpu.dot_dimension_numbers<[1], [0], [0], [1], [0, 0, 1, 1], [], []>} : vector<16x128xf32>, vector<128x128xf32>, vector<16x128xf32> -> vector<16x128xf32>
    %c0_9 = arith.constant 0 : index
    %c0_10 = arith.constant 0 : index
    %11 = vector.load %arg5[%c0_9, %c0_10] : memref<1x128xf32, #tpu.memory_space<vmem>>, vector<1x128xf32>
    %12 = vector.broadcast %11 : vector<1x128xf32> to vector<16x128xf32>
    %13 = arith.addf %10, %12 : vector<16x128xf32>
    %cst_11 = arith.constant 0.00999999977 : f32
    %14 = vector.broadcast %cst_11 : f32 to vector<16x128xf32>
    %15 = arith.mulf %14, %13 : vector<16x128xf32>
    %16 = arith.maximumf %13, %15 : vector<16x128xf32>
    %c0_12 = arith.constant 0 : index
    %c0_13 = arith.constant 0 : index
    %17 = vector.load %arg6[%c0_12, %c0_13] : memref<128x128xf32, #tpu.memory_space<vmem>>, vector<128x128xf32>
    %cst_14 = arith.constant dense<0.000000e+00> : vector<16x128xf32>
    %18 = tpu.matmul %16, %17, %cst_14 {dimension_numbers = #tpu.dot_dimension_numbers<[1], [0], [0], [1], [0, 0, 1, 1], [], []>} : vector<16x128xf32>, vector<128x128xf32>, vector<16x128xf32> -> vector<16x128xf32>
    %c0_15 = arith.constant 0 : index
    %c0_16 = arith.constant 0 : index
    %19 = vector.load %arg7[%c0_15, %c0_16] : memref<1x128xf32, #tpu.memory_space<vmem>>, vector<1x128xf32>
    %20 = vector.broadcast %19 : vector<1x128xf32> to vector<16x128xf32>
    %21 = arith.addf %18, %20 : vector<16x128xf32>
    %cst_17 = arith.constant 0.00999999977 : f32
    %22 = vector.broadcast %cst_17 : f32 to vector<16x128xf32>
    %23 = arith.mulf %22, %21 : vector<16x128xf32>
    %24 = arith.maximumf %21, %23 : vector<16x128xf32>
    %c0_18 = arith.constant 0 : index
    %c0_19 = arith.constant 0 : index
    %25 = vector.load %arg8[%c0_18, %c0_19] : memref<128x128xf32, #tpu.memory_space<vmem>>, vector<128x128xf32>
    %cst_20 = arith.constant dense<0.000000e+00> : vector<16x128xf32>
    %26 = tpu.matmul %24, %25, %cst_20 {dimension_numbers = #tpu.dot_dimension_numbers<[1], [0], [0], [1], [0, 0, 1, 1], [], []>} : vector<16x128xf32>, vector<128x128xf32>, vector<16x128xf32> -> vector<16x128xf32>
    %c0_21 = arith.constant 0 : index
    %c0_22 = arith.constant 0 : index
    %27 = vector.load %arg9[%c0_21, %c0_22] : memref<1x128xf32, #tpu.memory_space<vmem>>, vector<1x128xf32>
    %28 = vector.broadcast %27 : vector<1x128xf32> to vector<16x128xf32>
    %29 = arith.addf %26, %28 : vector<16x128xf32>
    %cst_23 = arith.constant 0.00999999977 : f32
    %30 = vector.broadcast %cst_23 : f32 to vector<16x128xf32>
    %31 = arith.mulf %30, %29 : vector<16x128xf32>
    %32 = arith.maximumf %29, %31 : vector<16x128xf32>
    %c0_24 = arith.constant 0 : index
    %c0_25 = arith.constant 0 : index
    %33 = vector.load %arg10[%c0_24, %c0_25] : memref<16x128xf32, #tpu.memory_space<vmem>>, vector<16x128xf32>
    tpu.vector_store %arg10[%c0_24, %c0_25], %32 {strides = array<i32>} : memref<16x128xf32, #tpu.memory_space<vmem>>, vector<16x128xf32>,
    return
  }
  func.func @transform_0(%arg0: i32) -> (i32, i32) {
    %c0_i32 = arith.constant 0 : i32
    %c0_i32_0 = arith.constant 0 : i32
    return %arg0, %c0_i32 : i32, i32
  }
  func.func @transform_1(%arg0: i32) -> (i32, i32) {
    %c0_i32 = arith.constant 0 : i32
    %c0_i32_0 = arith.constant 0 : i32
    %c0_i32_1 = arith.constant 0 : i32
    return %c0_i32, %c0_i32_0 : i32, i32
  }
  func.func @transform_2(%arg0: i32) -> (i32, i32) {
    %c0_i32 = arith.constant 0 : i32
    %c0_i32_0 = arith.constant 0 : i32
    %c0_i32_1 = arith.constant 0 : i32
    return %c0_i32, %c0_i32_0 : i32, i32
  }
  func.func @transform_3(%arg0: i32) -> (i32, i32) {
    %c0_i32 = arith.constant 0 : i32
    %c0_i32_0 = arith.constant 0 : i32
    %c0_i32_1 = arith.constant 0 : i32
    return %c0_i32, %c0_i32_0 : i32, i32
  }
  func.func @transform_4(%arg0: i32) -> (i32, i32) {
    %c0_i32 = arith.constant 0 : i32
    %c0_i32_0 = arith.constant 0 : i32
    %c0_i32_1 = arith.constant 0 : i32
    return %c0_i32, %c0_i32_0 : i32, i32
  }
  func.func @transform_5(%arg0: i32) -> (i32, i32) {
    %c0_i32 = arith.constant 0 : i32
    %c0_i32_0 = arith.constant 0 : i32
    %c0_i32_1 = arith.constant 0 : i32
    return %c0_i32, %c0_i32_0 : i32, i32
  }
  func.func @transform_6(%arg0: i32) -> (i32, i32) {
    %c0_i32 = arith.constant 0 : i32
    %c0_i32_0 = arith.constant 0 : i32
    %c0_i32_1 = arith.constant 0 : i32
    return %c0_i32, %c0_i32_0 : i32, i32
  }
  func.func @transform_7(%arg0: i32) -> (i32, i32) {
    %c0_i32 = arith.constant 0 : i32
    %c0_i32_0 = arith.constant 0 : i32
    %c0_i32_1 = arith.constant 0 : i32
    return %c0_i32, %c0_i32_0 : i32, i32
  }
  func.func @transform_8(%arg0: i32) -> (i32, i32) {
    %c0_i32 = arith.constant 0 : i32
    %c0_i32_0 = arith.constant 0 : i32
    %c0_i32_1 = arith.constant 0 : i32
    return %c0_i32, %c0_i32_0 : i32, i32
  }
  func.func @transform_9(%arg0: i32) -> (i32, i32) {
    %c0_i32 = arith.constant 0 : i32
    %c0_i32_0 = arith.constant 0 : i32
    return %arg0, %c0_i32 : i32, i32
  }
}

</mosaic_0001>

<llo_original>
// kernel: tpu_custom_call.1
$region0: #{tpu_custom_call.1}
  #allocation0 [shape = 'u32[]', space=smem, size = 0x4, offset = 0x4, fixed_abs, tag = 'smem constant byte address 0x4 - core index']
  #allocation1 [shape = 'u32[144,128]{1,0:T(1,128)}', space=vmem, size = 0x12000, scoped, tag = 'internal scratch']
  %s0 = inlined_call_operand.hbm [shape: f32[12,128], index: 0, kind: input, shape index: {}]
  %s1 = inlined_call_operand.hbm [shape: f32[128,128], index: 1, kind: input, shape index: {}]
  %s2 = inlined_call_operand.vmem [shape: f32[1,128], index: 2, kind: input, shape index: {}]
  %s3 = inlined_call_operand.hbm [shape: f32[128,128], index: 3, kind: input, shape index: {}]
  %s4 = inlined_call_operand.vmem [shape: f32[1,128], index: 4, kind: input, shape index: {}]
  %s5 = inlined_call_operand.hbm [shape: f32[128,128], index: 5, kind: input, shape index: {}]
  %s6 = inlined_call_operand.vmem [shape: f32[1,128], index: 6, kind: input, shape index: {}]
  %s7 = inlined_call_operand.hbm [shape: f32[128,128], index: 7, kind: input, shape index: {}]
  %s8 = inlined_call_operand.vmem [shape: f32[1,128], index: 8, kind: input, shape index: {}]
  %s9 = inlined_call_operand.hbm [shape: f32[12,128], index: 9, kind: output, shape index: {}]
  %s10 = sld [smem:[#allocation0]]
  $region66: #{tpu_custom_call.1} parent=0
    _
  %s12 = ssub.s32 1, %s10
  %s13 = scalar_select 0, %s12, %s10
  $region1: #{tpu_custom_call.1} parent=0
    #allocation2 [shape = 'u8[8192]{0}', space=vmem, size = 0x2000, scoped, tag = 'input window, operand 0, single buffered']
    #allocation3 [shape = 's32[1]{0}', space=sflag, size = 0x4, scoped, tag = 'scoped memory for tpu_custom_call.1']
    #allocation4 [shape = 's32[1]{0}', space=sflag, size = 0x4, scoped, tag = 'scoped memory for tpu_custom_call.1']
    #allocation5 [shape = 'u8[65536]{0}', space=vmem, size = 0x10000, scoped, tag = 'input window, operand 1, single buffered']
    #allocation6 [shape = 's32[1]{0}', space=sflag, size = 0x4, scoped, tag = 'scoped memory for tpu_custom_call.1']
    #allocation7 [shape = 'u8[65536]{0}', space=vmem, size = 0x10000, scoped, tag = 'input window, operand 3, single buffered']
    #allocation8 [shape = 'u8[65536]{0}', space=vmem, size = 0x10000, scoped, tag = 'input window, operand 5, single buffered']
    #allocation9 [shape = 's32[1]{0}', space=sflag, size = 0x4, scoped, tag = 'scoped memory for tpu_custom_call.1']
    #allocation10 [shape = 'u8[65536]{0}', space=vmem, size = 0x10000, scoped, tag = 'input window, operand 7, single buffered']
    #allocation11 [shape = 'u8[8192]{0}', space=vmem, size = 0x2000, scoped, tag = 'output window, operand 0, single buffered']
    %14 = vsyncpa [#allocation3], 0
    %15 = vsyncpa [#allocation6], 0
    %16 = vsyncpa [#allocation9], 0
    %17 = vsyncpa [#allocation4], 0
    // Predicated region
    $region2: #{tpu_custom_call.1} parent=1 // pred_check
      _
    $region3: #{tpu_custom_call.1} parent=1 // pred_check_branch
      %19 = sbr.rel (0) target = $region5
    $region4: #{tpu_custom_call.1} parent=1 // pred_region
      %s21 = ssub.s32 256, 256
      %22 = vsyncadd [#allocation3], %s21
      %s23 = sshll.u32 [#allocation2], 4
      %s24 = int_to_ptr.vmem [resolvable:$true] %s23
      %29 = dma.hbm_to_vmem [thread:$0]  %s0, 256, %s24, [#allocation3], 128, 128, 8
    $region5: #{tpu_custom_call.1} parent=1 // pred_fallthru
      _
    // Predicated region
    $region6: #{tpu_custom_call.1} parent=1 // pred_check
      _
    $region7: #{tpu_custom_call.1} parent=1 // pred_check_branch
      %31 = sbr.rel (0) target = $region9
    $region8: #{tpu_custom_call.1} parent=1 // pred_region
      %s33 = ssub.s32 2048, 2048
      %34 = vsyncadd [#allocation6], %s33
      %s35 = sshll.u32 [#allocation5], 4
      %s36 = int_to_ptr.vmem [resolvable:$true] %s35
      %41 = dma.hbm_to_vmem [thread:$0]  %s1, 2048, %s36, [#allocation6], 128, 128, 8
    $region9: #{tpu_custom_call.1} parent=1 // pred_fallthru
      _
    // Predicated region
    $region10: #{tpu_custom_call.1} parent=1 // pred_check
      _
    $region11: #{tpu_custom_call.1} parent=1 // pred_check_branch
      %43 = sbr.rel (0) target = $region13
    $region12: #{tpu_custom_call.1} parent=1 // pred_region
      _
    $region13: #{tpu_custom_call.1} parent=1 // pred_fallthru
      _
    // Predicated region
    $region14: #{tpu_custom_call.1} parent=1 // pred_check
      _
    $region15: #{tpu_custom_call.1} parent=1 // pred_check_branch
      %45 = sbr.rel (0) target = $region17
    $region16: #{tpu_custom_call.1} parent=1 // pred_region
      %s47 = ssub.s32 2048, 2048
      %48 = vsyncadd [#allocation6], %s47
      %s49 = sshll.u32 [#allocation7], 4
      %s50 = int_to_ptr.vmem [resolvable:$true] %s49
      %55 = dma.hbm_to_vmem [thread:$0]  %s3, 2048, %s50, [#allocation6], 128, 128, 8
    $region17: #{tpu_custom_call.1} parent=1 // pred_fallthru
      _
    // Predicated region
    $region18: #{tpu_custom_call.1} parent=1 // pred_check
      _
    $region19: #{tpu_custom_call.1} parent=1 // pred_check_branch
      %57 = sbr.rel (0) target = $region21
    $region20: #{tpu_custom_call.1} parent=1 // pred_region
      _
    $region21: #{tpu_custom_call.1} parent=1 // pred_fallthru
      _
    // Predicated region
    $region22: #{tpu_custom_call.1} parent=1 // pred_check
      _
    $region23: #{tpu_custom_call.1} parent=1 // pred_check_branch
      %59 = sbr.rel (0) target = $region25
    $region24: #{tpu_custom_call.1} parent=1 // pred_region
      %s61 = ssub.s32 2048, 2048
      %62 = vsyncadd [#allocation9], %s61
      %s63 = sshll.u32 [#allocation8], 4
      %s64 = int_to_ptr.vmem [resolvable:$true] %s63
      %69 = dma.hbm_to_vmem [thread:$0]  %s5, 2048, %s64, [#allocation9], 128, 128, 8
    $region25: #{tpu_custom_call.1} parent=1 // pred_fallthru
      _
    // Predicated region
    $region26: #{tpu_custom_call.1} parent=1 // pred_check
      _
    $region27: #{tpu_custom_call.1} parent=1 // pred_check_branch
      %71 = sbr.rel (0) target = $region29
    $region28: #{tpu_custom_call.1} parent=1 // pred_region
      _
    $region29: #{tpu_custom_call.1} parent=1 // pred_fallthru
      _
    // Predicated region
    $region30: #{tpu_custom_call.1} parent=1 // pred_check
      _
    $region31: #{tpu_custom_call.1} parent=1 // pred_check_branch
      %73 = sbr.rel (0) target = $region33
    $region32: #{tpu_custom_call.1} parent=1 // pred_region
      %s75 = ssub.s32 2048, 2048
      %76 = vsyncadd [#allocation9], %s75
      %s77 = sshll.u32 [#allocation10], 4
      %s78 = int_to_ptr.vmem [resolvable:$true] %s77
      %83 = dma.hbm_to_vmem [thread:$0]  %s7, 2048, %s78, [#allocation9], 128, 128, 8
    $region33: #{tpu_custom_call.1} parent=1 // pred_fallthru
      _
    // Predicated region
    $region34: #{tpu_custom_call.1} parent=1 // pred_check
      _
    $region35: #{tpu_custom_call.1} parent=1 // pred_check_branch
      %85 = sbr.rel (0) target = $region37
    $region36: #{tpu_custom_call.1} parent=1 // pred_region
      _
    $region37: #{tpu_custom_call.1} parent=1 // pred_fallthru
      _
    // Predicated region
    $region38: #{tpu_custom_call.1} parent=1 // pred_check
      _
    $region39: #{tpu_custom_call.1} parent=1 // pred_check_branch
      %87 = sbr.rel (0) target = $region41
    $region40: #{tpu_custom_call.1} parent=1 // pred_region
      %88 = dma.done [#allocation3], 256
    $region41: #{tpu_custom_call.1} parent=1 // pred_fallthru
      _
    // Predicated region
    $region42: #{tpu_custom_call.1} parent=1 // pred_check
      _
    $region43: #{tpu_custom_call.1} parent=1 // pred_check_branch
      %90 = sbr.rel (0) target = $region45
    $region44: #{tpu_custom_call.1} parent=1 // pred_region
      %91 = dma.done [#allocation6], 2048
    $region45: #{tpu_custom_call.1} parent=1 // pred_fallthru
      _
    // Predicated region
    $region46: #{tpu_custom_call.1} parent=1 // pred_check
      _
    $region47: #{tpu_custom_call.1} parent=1 // pred_check_branch
      %93 = sbr.rel (0) target = $region49
    $region48: #{tpu_custom_call.1} parent=1 // pred_region
      %94 = dma.done [#allocation6], 2048
    $region49: #{tpu_custom_call.1} parent=1 // pred_fallthru
      _
    // Predicated region
    $region50: #{tpu_custom_call.1} parent=1 // pred_check
      _
    $region51: #{tpu_custom_call.1} parent=1 // pred_check_branch
      %96 = sbr.rel (0) target = $region53
    $region52: #{tpu_custom_call.1} parent=1 // pred_region
      %97 = dma.done [#allocation9], 2048
    $region53: #{tpu_custom_call.1} parent=1 // pred_fallthru
      _
    // Predicated region
    $region54: #{tpu_custom_call.1} parent=1 // pred_check
      _
    $region55: #{tpu_custom_call.1} parent=1 // pred_check_branch
      %99 = sbr.rel (0) target = $region57
    $region56: #{tpu_custom_call.1} parent=1 // pred_region
      %100 = dma.done [#allocation9], 2048
    $region57: #{tpu_custom_call.1} parent=1 // pred_fallthru
      _
    %v101 = vld [vmem:[#allocation2] sm:$0xff]
    %v102 = vld [vmem:[#allocation2 + $0x8] sm:$0xff]
    %v103 = vld [vmem:[#allocation5] sm:$0xff]
    %v104 = vld [vmem:[#allocation5 + $0x8] sm:$0xff]
    %v105 = vld [vmem:[#allocation5 + $0x10] sm:$0xff]
    %v106 = vld [vmem:[#allocation5 + $0x18] sm:$0xff]
    %v107 = vld [vmem:[#allocation5 + $0x20] sm:$0xff]
    %v108 = vld [vmem:[#allocation5 + $0x28] sm:$0xff]
    %v109 = vld [vmem:[#allocation5 + $0x30] sm:$0xff]
    %v110 = vld [vmem:[#allocation5 + $0x38] sm:$0xff]
    %v111 = vld [vmem:[#allocation5 + $0x40] sm:$0xff]
    %v112 = vld [vmem:[#allocation5 + $0x48] sm:$0xff]
    %v113 = vld [vmem:[#allocation5 + $0x50] sm:$0xff]
    %v114 = vld [vmem:[#allocation5 + $0x58] sm:$0xff]
    %v115 = vld [vmem:[#allocation5 + $0x60] sm:$0xff]
    %v116 = vld [vmem:[#allocation5 + $0x68] sm:$0xff]
    %v117 = vld [vmem:[#allocation5 + $0x70] sm:$0xff]
    %v118 = vld [vmem:[#allocation5 + $0x78] sm:$0xff]
    %v119 = vld [vmem:[%s2] sm:$0x1]
    %v121 = vlaneseq
    %v122 = vshrl.u32 %v121, 7
    %v123 = vsub.s32 0, %v122
    %v124 = vrot.slane %v119, %v123
    %126 = vmatprep.subr.mxu0 0.0
    %127 = vmatpush1.msra.mxu0 %v118
    %128 = vmatprep.subr.mxu0 0.0
    %129 = vmatpush1.msra.mxu0 %v117
    %130 = vmatprep.subr.mxu0 0.0
    %131 = vmatpush1.msra.mxu0 %v116
    %132 = vmatprep.subr.mxu0 0.0
    %133 = vmatpush1.msra.mxu0 %v115
    %134 = vmatprep.subr.mxu0 0.0
    %135 = vmatpush1.msra.mxu0 %v114
    %136 = vmatprep.subr.mxu0 0.0
    %137 = vmatpush1.msra.mxu0 %v113
    %138 = vmatprep.subr.mxu0 0.0
    %139 = vmatpush1.msra.mxu0 %v112
    %140 = vmatprep.subr.mxu0 0.0
    %141 = vmatpush1.msra.mxu0 %v111
    %142 = vmatprep.subr.mxu0 0.0
    %143 = vmatpush1.msra.mxu0 %v110
    %144 = vmatprep.subr.mxu0 0.0
    %145 = vmatpush1.msra.mxu0 %v109
    %146 = vmatprep.subr.mxu0 0.0
    %147 = vmatpush1.msra.mxu0 %v108
    %148 = vmatprep.subr.mxu0 0.0
    %149 = vmatpush1.msra.mxu0 %v107
    %150 = vmatprep.subr.mxu0 0.0
    %151 = vmatpush1.msra.mxu0 %v106
    %152 = vmatprep.subr.mxu0 0.0
    %153 = vmatpush1.msra.mxu0 %v105
    %154 = vmatprep.subr.mxu0 0.0
    %155 = vmatpush1.msra.mxu0 %v104
    %156 = vmatprep.subr.mxu0 0.0
    %157 = vmatpush1.msra.mxu0 %v103
    %158 = vmatprep.subr.mxu0 0.0
    %159 = vmatpush2.msra.mxu0 0.0
    %160 = vmatprep.subr.mxu0 0.0
    %161 = vmatpush2.msra.mxu0 0.0
    %162 = vmatprep.subr.mxu0 0.0
    %163 = vmatpush2.msra.mxu0 0.0
    %164 = vmatprep.subr.mxu0 0.0
    %165 = vmatpush2.msra.mxu0 0.0
    %166 = vmatprep.subr.mxu0 0.0
    %167 = vmatpush2.msra.mxu0 0.0
    %168 = vmatprep.subr.mxu0 0.0
    %169 = vmatpush2.msra.mxu0 0.0
    %170 = vmatprep.subr.mxu0 0.0
    %171 = vmatpush2.msra.mxu0 0.0
    %172 = vmatprep.subr.mxu0 0.0
    %173 = vmatpush2.msra.mxu0 0.0
    %174 = vmatprep.subr.mxu0 0.0
    %175 = vmatpush2.msra.mxu0 0.0
    %176 = vmatprep.subr.mxu0 0.0
    %177 = vmatpush2.msra.mxu0 0.0
    %178 = vmatprep.subr.mxu0 0.0
    %179 = vmatpush2.msra.mxu0 0.0
    %180 = vmatprep.subr.mxu0 0.0
    %181 = vmatpush2.msra.mxu0 0.0
    %182 = vmatprep.subr.mxu0 0.0
    %183 = vmatpush2.msra.mxu0 0.0
    %184 = vmatprep.subr.mxu0 0.0
    %185 = vmatpush2.msra.mxu0 0.0
    %186 = vmatprep.subr.mxu0 0.0
    %187 = vmatpush2.msra.mxu0 0.0
    %188 = vmatprep.subr.mxu0 0.0
    %189 = vmatpush2.msra.mxu0 0.0
    %190 = vmatprep.mubr.f32.mxu0 0.0
    %191 = vmatmul.mubr.f32.gmra.mxu0 %v101
    %v192 = vpop.f32.mrf.mxu0
    %v193 = vadd.f32 %v124, %v192
    %v194 = vpop.f32.mrf.mxu0
    %195 = vmatprep.mubr.f32.mxu0 0.0
    %196 = vmatmul.mubr.f32.gmra.mxu0 %v102
    %v197 = vpop.f32.mrf.mxu0
    %v198 = vadd.f32 %v124, %v197
    %v199 = vpop.f32.mrf.mxu0
    %200 = vdwg.mxu0
    %v201 = vmul.f32 %v193, 0.01
    %v202 = vmul.f32 %v198, 0.01
    %v203 = vmax.f32 %v193, %v201
    %v204 = vmax.f32 %v198, %v202
    %v205 = vld [vmem:[#allocation7] sm:$0xff]
    %v206 = vld [vmem:[#allocation7 + $0x8] sm:$0xff]
    %v207 = vld [vmem:[#allocation7 + $0x10] sm:$0xff]
    %v208 = vld [vmem:[#allocation7 + $0x18] sm:$0xff]
    %v209 = vld [vmem:[#allocation7 + $0x20] sm:$0xff]
    %v210 = vld [vmem:[#allocation7 + $0x28] sm:$0xff]
    %v211 = vld [vmem:[#allocation7 + $0x30] sm:$0xff]
    %v212 = vld [vmem:[#allocation7 + $0x38] sm:$0xff]
    %v213 = vld [vmem:[#allocation7 + $0x40] sm:$0xff]
    %v214 = vld [vmem:[#allocation7 + $0x48] sm:$0xff]
    %v215 = vld [vmem:[#allocation7 + $0x50] sm:$0xff]
    %v216 = vld [vmem:[#allocation7 + $0x58] sm:$0xff]
    %v217 = vld [vmem:[#allocation7 + $0x60] sm:$0xff]
    %v218 = vld [vmem:[#allocation7 + $0x68] sm:$0xff]
    %v219 = vld [vmem:[#allocation7 + $0x70] sm:$0xff]
    %v220 = vld [vmem:[#allocation7 + $0x78] sm:$0xff]
    %v221 = vld [vmem:[%s4] sm:$0x1]
    %v223 = vlaneseq
    %v224 = vshrl.u32 %v223, 7
    %v225 = vsub.s32 0, %v224
    %v226 = vrot.slane %v221, %v225
    %228 = vmatprep.subr.mxu0 0.0
    %229 = vmatpush1.msra.mxu0 %v220
    %230 = vmatprep.subr.mxu0 0.0
    %231 = vmatpush1.msra.mxu0 %v219
    %232 = vmatprep.subr.mxu0 0.0
    %233 = vmatpush1.msra.mxu0 %v218
    %234 = vmatprep.subr.mxu0 0.0
    %235 = vmatpush1.msra.mxu0 %v217
    %236 = vmatprep.subr.mxu0 0.0
    %237 = vmatpush1.msra.mxu0 %v216
    %238 = vmatprep.subr.mxu0 0.0
    %239 = vmatpush1.msra.mxu0 %v215
    %240 = vmatprep.subr.mxu0 0.0
    %241 = vmatpush1.msra.mxu0 %v214
    %242 = vmatprep.subr.mxu0 0.0
    %243 = vmatpush1.msra.mxu0 %v213
    %244 = vmatprep.subr.mxu0 0.0
    %245 = vmatpush1.msra.mxu0 %v212
    %246 = vmatprep.subr.mxu0 0.0
    %247 = vmatpush1.msra.mxu0 %v211
    %248 = vmatprep.subr.mxu0 0.0
    %249 = vmatpush1.msra.mxu0 %v210
    %250 = vmatprep.subr.mxu0 0.0
    %251 = vmatpush1.msra.mxu0 %v209
    %252 = vmatprep.subr.mxu0 0.0
    %253 = vmatpush1.msra.mxu0 %v208
    %254 = vmatprep.subr.mxu0 0.0
    %255 = vmatpush1.msra.mxu0 %v207
    %256 = vmatprep.subr.mxu0 0.0
    %257 = vmatpush1.msra.mxu0 %v206
    %258 = vmatprep.subr.mxu0 0.0
    %259 = vmatpush1.msra.mxu0 %v205
    %260 = vmatprep.subr.mxu0 0.0
    %261 = vmatpush2.msra.mxu0 0.0
    %262 = vmatprep.subr.mxu0 0.0
    %263 = vmatpush2.msra.mxu0 0.0
    %264 = vmatprep.subr.mxu0 0.0
    %265 = vmatpush2.msra.mxu0 0.0
    %266 = vmatprep.subr.mxu0 0.0
    %267 = vmatpush2.msra.mxu0 0.0
    %268 = vmatprep.subr.mxu0 0.0
    %269 = vmatpush2.msra.mxu0 0.0
    %270 = vmatprep.subr.mxu0 0.0
    %271 = vmatpush2.msra.mxu0 0.0
    %272 = vmatprep.subr.mxu0 0.0
    %273 = vmatpush2.msra.mxu0 0.0
    %274 = vmatprep.subr.mxu0 0.0
    %275 = vmatpush2.msra.mxu0 0.0
    %276 = vmatprep.subr.mxu0 0.0
    %277 = vmatpush2.msra.mxu0 0.0
    %278 = vmatprep.subr.mxu0 0.0
    %279 = vmatpush2.msra.mxu0 0.0
    %280 = vmatprep.subr.mxu0 0.0
    %281 = vmatpush2.msra.mxu0 0.0
    %282 = vmatprep.subr.mxu0 0.0
    %283 = vmatpush2.msra.mxu0 0.0
    %284 = vmatprep.subr.mxu0 0.0
    %285 = vmatpush2.msra.mxu0 0.0
    %286 = vmatprep.subr.mxu0 0.0
    %287 = vmatpush2.msra.mxu0 0.0
    %288 = vmatprep.subr.mxu0 0.0
    %289 = vmatpush2.msra.mxu0 0.0
    %290 = vmatprep.subr.mxu0 0.0
    %291 = vmatpush2.msra.mxu0 0.0
    %292 = vmatprep.mubr.f32.mxu0 0.0
    %293 = vmatmul.mubr.f32.gmra.mxu0 %v203
    %v294 = vpop.f32.mrf.mxu0
    %v295 = vadd.f32 %v226, %v294
    %v296 = vpop.f32.mrf.mxu0
    %297 = vmatprep.mubr.f32.mxu0 0.0
    %298 = vmatmul.mubr.f32.gmra.mxu0 %v204
    %v299 = vpop.f32.mrf.mxu0
    %v300 = vadd.f32 %v226, %v299
    %v301 = vpop.f32.mrf.mxu0
    %302 = vdwg.mxu0
    %v303 = vmul.f32 %v295, 0.01
    %v304 = vmul.f32 %v300, 0.01
    %v305 = vmax.f32 %v295, %v303
    %v306 = vmax.f32 %v300, %v304
    %v307 = vld [vmem:[#allocation8] sm:$0xff]
    %v308 = vld [vmem:[#allocation8 + $0x8] sm:$0xff]
    %v309 = vld [vmem:[#allocation8 + $0x10] sm:$0xff]
    %v310 = vld [vmem:[#allocation8 + $0x18] sm:$0xff]
    %v311 = vld [vmem:[#allocation8 + $0x20] sm:$0xff]
    %v312 = vld [vmem:[#allocation8 + $0x28] sm:$0xff]
    %v313 = vld [vmem:[#allocation8 + $0x30] sm:$0xff]
    %v314 = vld [vmem:[#allocation8 + $0x38] sm:$0xff]
    %v315 = vld [vmem:[#allocation8 + $0x40] sm:$0xff]
    %v316 = vld [vmem:[#allocation8 + $0x48] sm:$0xff]
    %v317 = vld [vmem:[#allocation8 + $0x50] sm:$0xff]
    %v318 = vld [vmem:[#allocation8 + $0x58] sm:$0xff]
    %v319 = vld [vmem:[#allocation8 + $0x60] sm:$0xff]
    %v320 = vld [vmem:[#allocation8 + $0x68] sm:$0xff]
    %v321 = vld [vmem:[#allocation8 + $0x70] sm:$0xff]
    %v322 = vld [vmem:[#allocation8 + $0x78] sm:$0xff]
    %v323 = vld [vmem:[%s6] sm:$0x1]
    %v325 = vlaneseq
    %v326 = vshrl.u32 %v325, 7
    %v327 = vsub.s32 0, %v326
    %v328 = vrot.slane %v323, %v327
    %330 = vmatprep.subr.mxu0 0.0
    %331 = vmatpush1.msra.mxu0 %v322
    %332 = vmatprep.subr.mxu0 0.0
    %333 = vmatpush1.msra.mxu0 %v321
    %334 = vmatprep.subr.mxu0 0.0
    %335 = vmatpush1.msra.mxu0 %v320
    %336 = vmatprep.subr.mxu0 0.0
    %337 = vmatpush1.msra.mxu0 %v319
    %338 = vmatprep.subr.mxu0 0.0
    %339 = vmatpush1.msra.mxu0 %v318
    %340 = vmatprep.subr.mxu0 0.0
    %341 = vmatpush1.msra.mxu0 %v317
    %342 = vmatprep.subr.mxu0 0.0
    %343 = vmatpush1.msra.mxu0 %v316
    %344 = vmatprep.subr.mxu0 0.0
    %345 = vmatpush1.msra.mxu0 %v315
    %346 = vmatprep.subr.mxu0 0.0
    %347 = vmatpush1.msra.mxu0 %v314
    %348 = vmatprep.subr.mxu0 0.0
    %349 = vmatpush1.msra.mxu0 %v313
    %350 = vmatprep.subr.mxu0 0.0
    %351 = vmatpush1.msra.mxu0 %v312
    %352 = vmatprep.subr.mxu0 0.0
    %353 = vmatpush1.msra.mxu0 %v311
    %354 = vmatprep.subr.mxu0 0.0
    %355 = vmatpush1.msra.mxu0 %v310
    %356 = vmatprep.subr.mxu0 0.0
    %357 = vmatpush1.msra.mxu0 %v309
    %358 = vmatprep.subr.mxu0 0.0
    %359 = vmatpush1.msra.mxu0 %v308
    %360 = vmatprep.subr.mxu0 0.0
    %361 = vmatpush1.msra.mxu0 %v307
    %362 = vmatprep.subr.mxu0 0.0
    %363 = vmatpush2.msra.mxu0 0.0
    %364 = vmatprep.subr.mxu0 0.0
    %365 = vmatpush2.msra.mxu0 0.0
    %366 = vmatprep.subr.mxu0 0.0
    %367 = vmatpush2.msra.mxu0 0.0
    %368 = vmatprep.subr.mxu0 0.0
    %369 = vmatpush2.msra.mxu0 0.0
    %370 = vmatprep.subr.mxu0 0.0
    %371 = vmatpush2.msra.mxu0 0.0
    %372 = vmatprep.subr.mxu0 0.0
    %373 = vmatpush2.msra.mxu0 0.0
    %374 = vmatprep.subr.mxu0 0.0
    %375 = vmatpush2.msra.mxu0 0.0
    %376 = vmatprep.subr.mxu0 0.0
    %377 = vmatpush2.msra.mxu0 0.0
    %378 = vmatprep.subr.mxu0 0.0
    %379 = vmatpush2.msra.mxu0 0.0
    %380 = vmatprep.subr.mxu0 0.0
    %381 = vmatpush2.msra.mxu0 0.0
    %382 = vmatprep.subr.mxu0 0.0
    %383 = vmatpush2.msra.mxu0 0.0
    %384 = vmatprep.subr.mxu0 0.0
    %385 = vmatpush2.msra.mxu0 0.0
    %386 = vmatprep.subr.mxu0 0.0
    %387 = vmatpush2.msra.mxu0 0.0
    %388 = vmatprep.subr.mxu0 0.0
    %389 = vmatpush2.msra.mxu0 0.0
    %390 = vmatprep.subr.mxu0 0.0
    %391 = vmatpush2.msra.mxu0 0.0
    %392 = vmatprep.subr.mxu0 0.0
    %393 = vmatpush2.msra.mxu0 0.0
    %394 = vmatprep.mubr.f32.mxu0 0.0
    %395 = vmatmul.mubr.f32.gmra.mxu0 %v305
    %v396 = vpop.f32.mrf.mxu0
    %v397 = vadd.f32 %v328, %v396
    %v398 = vpop.f32.mrf.mxu0
    %399 = vmatprep.mubr.f32.mxu0 0.0
    %400 = vmatmul.mubr.f32.gmra.mxu0 %v306
    %v401 = vpop.f32.mrf.mxu0
    %v402 = vadd.f32 %v328, %v401
    %v403 = vpop.f32.mrf.mxu0
    %404 = vdwg.mxu0
    %v405 = vmul.f32 %v397, 0.01
    %v406 = vmul.f32 %v402, 0.01
    %v407 = vmax.f32 %v397, %v405
    %v408 = vmax.f32 %v402, %v406
    %v409 = vld [vmem:[#allocation10] sm:$0xff]
    %v410 = vld [vmem:[#allocation10 + $0x8] sm:$0xff]
    %v411 = vld [vmem:[#allocation10 + $0x10] sm:$0xff]
    %v412 = vld [vmem:[#allocation10 + $0x18] sm:$0xff]
    %v413 = vld [vmem:[#allocation10 + $0x20] sm:$0xff]
    %v414 = vld [vmem:[#allocation10 + $0x28] sm:$0xff]
    %v415 = vld [vmem:[#allocation10 + $0x30] sm:$0xff]
    %v416 = vld [vmem:[#allocation10 + $0x38] sm:$0xff]
    %v417 = vld [vmem:[#allocation10 + $0x40] sm:$0xff]
    %v418 = vld [vmem:[#allocation10 + $0x48] sm:$0xff]
    %v419 = vld [vmem:[#allocation10 + $0x50] sm:$0xff]
    %v420 = vld [vmem:[#allocation10 + $0x58] sm:$0xff]
    %v421 = vld [vmem:[#allocation10 + $0x60] sm:$0xff]
    %v422 = vld [vmem:[#allocation10 + $0x68] sm:$0xff]
    %v423 = vld [vmem:[#allocation10 + $0x70] sm:$0xff]
    %v424 = vld [vmem:[#allocation10 + $0x78] sm:$0xff]
    %v425 = vld [vmem:[%s8] sm:$0x1]
    %v427 = vlaneseq
    %v428 = vshrl.u32 %v427, 7
    %v429 = vsub.s32 0, %v428
    %v430 = vrot.slane %v425, %v429
    %432 = vmatprep.subr.mxu0 0.0
    %433 = vmatpush1.msra.mxu0 %v424
    %434 = vmatprep.subr.mxu0 0.0
    %435 = vmatpush1.msra.mxu0 %v423
    %436 = vmatprep.subr.mxu0 0.0
    %437 = vmatpush1.msra.mxu0 %v422
    %438 = vmatprep.subr.mxu0 0.0
    %439 = vmatpush1.msra.mxu0 %v421
    %440 = vmatprep.subr.mxu0 0.0
    %441 = vmatpush1.msra.mxu0 %v420
    %442 = vmatprep.subr.mxu0 0.0
    %443 = vmatpush1.msra.mxu0 %v419
    %444 = vmatprep.subr.mxu0 0.0
    %445 = vmatpush1.msra.mxu0 %v418
    %446 = vmatprep.subr.mxu0 0.0
    %447 = vmatpush1.msra.mxu0 %v417
    %448 = vmatprep.subr.mxu0 0.0
    %449 = vmatpush1.msra.mxu0 %v416
    %450 = vmatprep.subr.mxu0 0.0
    %451 = vmatpush1.msra.mxu0 %v415
    %452 = vmatprep.subr.mxu0 0.0
    %453 = vmatpush1.msra.mxu0 %v414
    %454 = vmatprep.subr.mxu0 0.0
    %455 = vmatpush1.msra.mxu0 %v413
    %456 = vmatprep.subr.mxu0 0.0
    %457 = vmatpush1.msra.mxu0 %v412
    %458 = vmatprep.subr.mxu0 0.0
    %459 = vmatpush1.msra.mxu0 %v411
    %460 = vmatprep.subr.mxu0 0.0
    %461 = vmatpush1.msra.mxu0 %v410
    %462 = vmatprep.subr.mxu0 0.0
    %463 = vmatpush1.msra.mxu0 %v409
    %464 = vmatprep.subr.mxu0 0.0
    %465 = vmatpush2.msra.mxu0 0.0
    %466 = vmatprep.subr.mxu0 0.0
    %467 = vmatpush2.msra.mxu0 0.0
    %468 = vmatprep.subr.mxu0 0.0
    %469 = vmatpush2.msra.mxu0 0.0
    %470 = vmatprep.subr.mxu0 0.0
    %471 = vmatpush2.msra.mxu0 0.0
    %472 = vmatprep.subr.mxu0 0.0
    %473 = vmatpush2.msra.mxu0 0.0
    %474 = vmatprep.subr.mxu0 0.0
    %475 = vmatpush2.msra.mxu0 0.0
    %476 = vmatprep.subr.mxu0 0.0
    %477 = vmatpush2.msra.mxu0 0.0
    %478 = vmatprep.subr.mxu0 0.0
    %479 = vmatpush2.msra.mxu0 0.0
    %480 = vmatprep.subr.mxu0 0.0
    %481 = vmatpush2.msra.mxu0 0.0
    %482 = vmatprep.subr.mxu0 0.0
    %483 = vmatpush2.msra.mxu0 0.0
    %484 = vmatprep.subr.mxu0 0.0
    %485 = vmatpush2.msra.mxu0 0.0
    %486 = vmatprep.subr.mxu0 0.0
    %487 = vmatpush2.msra.mxu0 0.0
    %488 = vmatprep.subr.mxu0 0.0
    %489 = vmatpush2.msra.mxu0 0.0
    %490 = vmatprep.subr.mxu0 0.0
    %491 = vmatpush2.msra.mxu0 0.0
    %492 = vmatprep.subr.mxu0 0.0
    %493 = vmatpush2.msra.mxu0 0.0
    %494 = vmatprep.subr.mxu0 0.0
    %495 = vmatpush2.msra.mxu0 0.0
    %496 = vmatprep.mubr.f32.mxu0 0.0
    %497 = vmatmul.mubr.f32.gmra.mxu0 %v407
    %v498 = vpop.f32.mrf.mxu0
    %v499 = vadd.f32 %v430, %v498
    %v500 = vpop.f32.mrf.mxu0
    %501 = vmatprep.mubr.f32.mxu0 0.0
    %502 = vmatmul.mubr.f32.gmra.mxu0 %v408
    %v503 = vpop.f32.mrf.mxu0
    %v504 = vadd.f32 %v430, %v503
    %v505 = vpop.f32.mrf.mxu0
    %506 = vdwg.mxu0
    %v507 = vmul.f32 %v499, 0.01
    %v508 = vmul.f32 %v504, 0.01
    %v509 = vmax.f32 %v499, %v507
    %v510 = vmax.f32 %v504, %v508
    %511 = vst [vmem:[#allocation11] sm:$0xff] %v509
    %512 = vst [vmem:[#allocation11 + $0x8] sm:$0xff] %v510
    // Predicated region
    $region58: #{tpu_custom_call.1} parent=1 // pred_check
      _
    $region59: #{tpu_custom_call.1} parent=1 // pred_check_branch
      %514 = sbr.rel (0) target = $region61
    $region60: #{tpu_custom_call.1} parent=1 // pred_region
      %s516 = ssub.s32 256, 256
      %517 = vsyncadd [#allocation4], %s516
      %s518 = sshll.u32 [#allocation11], 4
      %s519 = int_to_ptr.vmem [resolvable:$true] %s518
      %524 = dma.vmem_to_hbm [thread:$0]  %s519, 256, %s9, [#allocation4], 128, 128, 8
    $region61: #{tpu_custom_call.1} parent=1 // pred_fallthru
      _
    // Predicated region
    $region62: #{tpu_custom_call.1} parent=1 // pred_check
      _
    $region63: #{tpu_custom_call.1} parent=1 // pred_check_branch
      %526 = sbr.rel (0) target = $region65
    $region64: #{tpu_custom_call.1} parent=1 // pred_region
      %527 = dma.done [#allocation4], 256
    $region65: #{tpu_custom_call.1} parent=1 // pred_fallthru
      _
    %528 = vsyncpa [#allocation3], 1
    %529 = vsyncpa [#allocation6], 1
    %530 = vsyncpa [#allocation9], 1
    %531 = vsyncpa [#allocation4], 1

// kernel: tpu_custom_call.1
$region0: #{tpu_custom_call.1}
  #allocation0 [shape = 'u32[]', space=smem, size = 0x4, offset = 0x4, fixed_abs, tag = 'smem constant byte address 0x4 - core index']
  #allocation1 [shape = 'u32[144,128]{1,0:T(1,128)}', space=vmem, size = 0x12000, scoped, tag = 'internal scratch']
  %s0 = inlined_call_operand.hbm [shape: f32[12,128], index: 0, kind: input, shape index: {}]
  %s1 = inlined_call_operand.hbm [shape: f32[128,128], index: 1, kind: input, shape index: {}]
  %s2 = inlined_call_operand.vmem [shape: f32[1,128], index: 2, kind: input, shape index: {}]
  %s3 = inlined_call_operand.hbm [shape: f32[128,128], index: 3, kind: input, shape index: {}]
  %s4 = inlined_call_operand.vmem [shape: f32[1,128], index: 4, kind: input, shape index: {}]
  %s5 = inlined_call_operand.hbm [shape: f32[128,128], index: 5, kind: input, shape index: {}]
  %s6 = inlined_call_operand.vmem [shape: f32[1,128], index: 6, kind: input, shape index: {}]
  %s7 = inlined_call_operand.hbm [shape: f32[128,128], index: 7, kind: input, shape index: {}]
  %s8 = inlined_call_operand.vmem [shape: f32[1,128], index: 8, kind: input, shape index: {}]
  %s9 = inlined_call_operand.hbm [shape: f32[12,128], index: 9, kind: output, shape index: {}]
  %s10 = sld [smem:[#allocation0]]
  $region66: #{tpu_custom_call.1} parent=0
    _
  %s12 = ssub.s32 1, %s10
  %s13 = scalar_select 0, %s12, %s10
  $region1: #{tpu_custom_call.1} parent=0
    #allocation2 [shape = 'u8[8192]{0}', space=vmem, size = 0x2000, scoped, tag = 'input window, operand 0, single buffered']
    #allocation3 [shape = 's32[1]{0}', space=sflag, size = 0x4, scoped, tag = 'scoped memory for tpu_custom_call.1']
    #allocation4 [shape = 's32[1]{0}', space=sflag, size = 0x4, scoped, tag = 'scoped memory for tpu_custom_call.1']
    #allocation5 [shape = 'u8[65536]{0}', space=vmem, size = 0x10000, scoped, tag = 'input window, operand 1, single buffered']
    #allocation6 [shape = 's32[1]{0}', space=sflag, size = 0x4, scoped, tag = 'scoped memory for tpu_custom_call.1']
    #allocation7 [shape = 'u8[65536]{0}', space=vmem, size = 0x10000, scoped, tag = 'input window, operand 3, single buffered']
    #allocation8 [shape = 'u8[65536]{0}', space=vmem, size = 0x10000, scoped, tag = 'input window, operand 5, single buffered']
    #allocation9 [shape = 's32[1]{0}', space=sflag, size = 0x4, scoped, tag = 'scoped memory for tpu_custom_call.1']
    #allocation10 [shape = 'u8[65536]{0}', space=vmem, size = 0x10000, scoped, tag = 'input window, operand 7, single buffered']
    #allocation11 [shape = 'u8[8192]{0}', space=vmem, size = 0x2000, scoped, tag = 'output window, operand 0, single buffered']
    %14 = vsyncpa [#allocation3], 0
    %15 = vsyncpa [#allocation6], 0
    %16 = vsyncpa [#allocation9], 0
    %17 = vsyncpa [#allocation4], 0
    // Predicated region
    $region2: #{tpu_custom_call.1} parent=1 // pred_check
      _
    $region3: #{tpu_custom_call.1} parent=1 // pred_check_branch
      %19 = sbr.rel (0) target = $region5
    $region4: #{tpu_custom_call.1} parent=1 // pred_region
      %s21 = ssub.s32 256, 256
      %22 = vsyncadd [#allocation3], %s21
      %s23 = sshll.u32 [#allocation2], 4
      %s24 = int_to_ptr.vmem [resolvable:$true] %s23
      %29 = dma.hbm_to_vmem [thread:$0]  %s0, 256, %s24, [#allocation3], 128, 128, 8
    $region5: #{tpu_custom_call.1} parent=1 // pred_fallthru
      _
    // Predicated region
    $region6: #{tpu_custom_call.1} parent=1 // pred_check
      _
    $region7: #{tpu_custom_call.1} parent=1 // pred_check_branch
      %31 = sbr.rel (0) target = $region9
    $region8: #{tpu_custom_call.1} parent=1 // pred_region
      %s33 = ssub.s32 2048, 2048
      %34 = vsyncadd [#allocation6], %s33
      %s35 = sshll.u32 [#allocation5], 4
      %s36 = int_to_ptr.vmem [resolvable:$true] %s35
      %41 = dma.hbm_to_vmem [thread:$0]  %s1, 2048, %s36, [#allocation6], 128, 128, 8
    $region9: #{tpu_custom_call.1} parent=1 // pred_fallthru
      _
    // Predicated region
    $region10: #{tpu_custom_call.1} parent=1 // pred_check
      _
    $region11: #{tpu_custom_call.1} parent=1 // pred_check_branch
      %43 = sbr.rel (0) target = $region13
    $region12: #{tpu_custom_call.1} parent=1 // pred_region
      _
    $region13: #{tpu_custom_call.1} parent=1 // pred_fallthru
      _
    // Predicated region
    $region14: #{tpu_custom_call.1} parent=1 // pred_check
      _
    $region15: #{tpu_custom_call.1} parent=1 // pred_check_branch
      %45 = sbr.rel (0) target = $region17
    $region16: #{tpu_custom_call.1} parent=1 // pred_region
      %s47 = ssub.s32 2048, 2048
      %48 = vsyncadd [#allocation6], %s47
      %s49 = sshll.u32 [#allocation7], 4
      %s50 = int_to_ptr.vmem [resolvable:$true] %s49
      %55 = dma.hbm_to_vmem [thread:$0]  %s3, 2048, %s50, [#allocation6], 128, 128, 8
    $region17: #{tpu_custom_call.1} parent=1 // pred_fallthru
      _
    // Predicated region
    $region18: #{tpu_custom_call.1} parent=1 // pred_check
      _
    $region19: #{tpu_custom_call.1} parent=1 // pred_check_branch
      %57 = sbr.rel (0) target = $region21
    $region20: #{tpu_custom_call.1} parent=1 // pred_region
      _
    $region21: #{tpu_custom_call.1} parent=1 // pred_fallthru
      _
    // Predicated region
    $region22: #{tpu_custom_call.1} parent=1 // pred_check
      _
    $region23: #{tpu_custom_call.1} parent=1 // pred_check_branch
      %59 = sbr.rel (0) target = $region25
    $region24: #{tpu_custom_call.1} parent=1 // pred_region
      %s61 = ssub.s32 2048, 2048
      %62 = vsyncadd [#allocation9], %s61
      %s63 = sshll.u32 [#allocation8], 4
      %s64 = int_to_ptr.vmem [resolvable:$true] %s63
      %69 = dma.hbm_to_vmem [thread:$0]  %s5, 2048, %s64, [#allocation9], 128, 128, 8
    $region25: #{tpu_custom_call.1} parent=1 // pred_fallthru
      _
    // Predicated region
    $region26: #{tpu_custom_call.1} parent=1 // pred_check
      _
    $region27: #{tpu_custom_call.1} parent=1 // pred_check_branch
      %71 = sbr.rel (0) target = $region29
    $region28: #{tpu_custom_call.1} parent=1 // pred_region
      _
    $region29: #{tpu_custom_call.1} parent=1 // pred_fallthru
      _
    // Predicated region
    $region30: #{tpu_custom_call.1} parent=1 // pred_check
      _
    $region31: #{tpu_custom_call.1} parent=1 // pred_check_branch
      %73 = sbr.rel (0) target = $region33
    $region32: #{tpu_custom_call.1} parent=1 // pred_region
      %s75 = ssub.s32 2048, 2048
      %76 = vsyncadd [#allocation9], %s75
      %s77 = sshll.u32 [#allocation10], 4
      %s78 = int_to_ptr.vmem [resolvable:$true] %s77
      %83 = dma.hbm_to_vmem [thread:$0]  %s7, 2048, %s78, [#allocation9], 128, 128, 8
    $region33: #{tpu_custom_call.1} parent=1 // pred_fallthru
      _
    // Predicated region
    $region34: #{tpu_custom_call.1} parent=1 // pred_check
      _
    $region35: #{tpu_custom_call.1} parent=1 // pred_check_branch
      %85 = sbr.rel (0) target = $region37
    $region36: #{tpu_custom_call.1} parent=1 // pred_region
      _
    $region37: #{tpu_custom_call.1} parent=1 // pred_fallthru
      _
    // Predicated region
    $region38: #{tpu_custom_call.1} parent=1 // pred_check
      _
    $region39: #{tpu_custom_call.1} parent=1 // pred_check_branch
      %87 = sbr.rel (0) target = $region41
    $region40: #{tpu_custom_call.1} parent=1 // pred_region
      %88 = dma.done [#allocation3], 256
    $region41: #{tpu_custom_call.1} parent=1 // pred_fallthru
      _
    // Predicated region
    $region42: #{tpu_custom_call.1} parent=1 // pred_check
      _
    $region43: #{tpu_custom_call.1} parent=1 // pred_check_branch
      %90 = sbr.rel (0) target = $region45
    $region44: #{tpu_custom_call.1} parent=1 // pred_region
      %91 = dma.done [#allocation6], 2048
    $region45: #{tpu_custom_call.1} parent=1 // pred_fallthru
      _
    // Predicated region
    $region46: #{tpu_custom_call.1} parent=1 // pred_check
      _
    $region47: #{tpu_custom_call.1} parent=1 // pred_check_branch
      %93 = sbr.rel (0) target = $region49
    $region48: #{tpu_custom_call.1} parent=1 // pred_region
      %94 = dma.done [#allocation6], 2048
    $region49: #{tpu_custom_call.1} parent=1 // pred_fallthru
      _
    // Predicated region
    $region50: #{tpu_custom_call.1} parent=1 // pred_check
      _
    $region51: #{tpu_custom_call.1} parent=1 // pred_check_branch
      %96 = sbr.rel (0) target = $region53
    $region52: #{tpu_custom_call.1} parent=1 // pred_region
      %97 = dma.done [#allocation9], 2048
    $region53: #{tpu_custom_call.1} parent=1 // pred_fallthru
      _
    // Predicated region
    $region54: #{tpu_custom_call.1} parent=1 // pred_check
      _
    $region55: #{tpu_custom_call.1} parent=1 // pred_check_branch
      %99 = sbr.rel (0) target = $region57
    $region56: #{tpu_custom_call.1} parent=1 // pred_region
      %100 = dma.done [#allocation9], 2048
    $region57: #{tpu_custom_call.1} parent=1 // pred_fallthru
      _
    %v101 = vld [vmem:[#allocation2] sm:$0xff]
    %v102 = vld [vmem:[#allocation2 + $0x8] sm:$0xff]
    %v103 = vld [vmem:[#allocation5] sm:$0xff]
    %v104 = vld [vmem:[#allocation5 + $0x8] sm:$0xff]
    %v105 = vld [vmem:[#allocation5 + $0x10] sm:$0xff]
    %v106 = vld [vmem:[#allocation5 + $0x18] sm:$0xff]
    %v107 = vld [vmem:[#allocation5 + $0x20] sm:$0xff]
    %v108 = vld [vmem:[#allocation5 + $0x28] sm:$0xff]
    %v109 = vld [vmem:[#allocation5 + $0x30] sm:$0xff]
    %v110 = vld [vmem:[#allocation5 + $0x38] sm:$0xff]
    %v111 = vld [vmem:[#allocation5 + $0x40] sm:$0xff]
    %v112 = vld [vmem:[#allocation5 + $0x48] sm:$0xff]
    %v113 = vld [vmem:[#allocation5 + $0x50] sm:$0xff]
    %v114 = vld [vmem:[#allocation5 + $0x58] sm:$0xff]
    %v115 = vld [vmem:[#allocation5 + $0x60] sm:$0xff]
    %v116 = vld [vmem:[#allocation5 + $0x68] sm:$0xff]
    %v117 = vld [vmem:[#allocation5 + $0x70] sm:$0xff]
    %v118 = vld [vmem:[#allocation5 + $0x78] sm:$0xff]
    %v119 = vld [vmem:[%s2] sm:$0x1]
    %v121 = vlaneseq
    %v122 = vshrl.u32 %v121, 7
    %v123 = vsub.s32 0, %v122
    %v124 = vrot.slane %v119, %v123
    %126 = vmatprep.subr.mxu0 0.0
    %127 = vmatpush1.msra.mxu0 %v118
    %128 = vmatprep.subr.mxu0 0.0
    %129 = vmatpush1.msra.mxu0 %v117
    %130 = vmatprep.subr.mxu0 0.0
    %131 = vmatpush1.msra.mxu0 %v116
    %132 = vmatprep.subr.mxu0 0.0
    %133 = vmatpush1.msra.mxu0 %v115
    %134 = vmatprep.subr.mxu0 0.0
    %135 = vmatpush1.msra.mxu0 %v114
    %136 = vmatprep.subr.mxu0 0.0
    %137 = vmatpush1.msra.mxu0 %v113
    %138 = vmatprep.subr.mxu0 0.0
    %139 = vmatpush1.msra.mxu0 %v112
    %140 = vmatprep.subr.mxu0 0.0
    %141 = vmatpush1.msra.mxu0 %v111
    %142 = vmatprep.subr.mxu0 0.0
    %143 = vmatpush1.msra.mxu0 %v110
    %144 = vmatprep.subr.mxu0 0.0
    %145 = vmatpush1.msra.mxu0 %v109
    %146 = vmatprep.subr.mxu0 0.0
    %147 = vmatpush1.msra.mxu0 %v108
    %148 = vmatprep.subr.mxu0 0.0
    %149 = vmatpush1.msra.mxu0 %v107
    %150 = vmatprep.subr.mxu0 0.0
    %151 = vmatpush1.msra.mxu0 %v106
    %152 = vmatprep.subr.mxu0 0.0
    %153 = vmatpush1.msra.mxu0 %v105
    %154 = vmatprep.subr.mxu0 0.0
    %155 = vmatpush1.msra.mxu0 %v104
    %156 = vmatprep.subr.mxu0 0.0
    %157 = vmatpush1.msra.mxu0 %v103
    %158 = vmatprep.subr.mxu0 0.0
    %159 = vmatpush2.msra.mxu0 0.0
    %160 = vmatprep.subr.mxu0 0.0
    %161 = vmatpush2.msra.mxu0 0.0
    %162 = vmatprep.subr.mxu0 0.0
    %163 = vmatpush2.msra.mxu0 0.0
    %164 = vmatprep.subr.mxu0 0.0
    %165 = vmatpush2.msra.mxu0 0.0
    %166 = vmatprep.subr.mxu0 0.0
    %167 = vmatpush2.msra.mxu0 0.0
    %168 = vmatprep.subr.mxu0 0.0
    %169 = vmatpush2.msra.mxu0 0.0
    %170 = vmatprep.subr.mxu0 0.0
    %171 = vmatpush2.msra.mxu0 0.0
    %172 = vmatprep.subr.mxu0 0.0
    %173 = vmatpush2.msra.mxu0 0.0
    %174 = vmatprep.subr.mxu0 0.0
    %175 = vmatpush2.msra.mxu0 0.0
    %176 = vmatprep.subr.mxu0 0.0
    %177 = vmatpush2.msra.mxu0 0.0
    %178 = vmatprep.subr.mxu0 0.0
    %179 = vmatpush2.msra.mxu0 0.0
    %180 = vmatprep.subr.mxu0 0.0
    %181 = vmatpush2.msra.mxu0 0.0
    %182 = vmatprep.subr.mxu0 0.0
    %183 = vmatpush2.msra.mxu0 0.0
    %184 = vmatprep.subr.mxu0 0.0
    %185 = vmatpush2.msra.mxu0 0.0
    %186 = vmatprep.subr.mxu0 0.0
    %187 = vmatpush2.msra.mxu0 0.0
    %188 = vmatprep.subr.mxu0 0.0
    %189 = vmatpush2.msra.mxu0 0.0
    %190 = vmatprep.mubr.f32.mxu0 0.0
    %191 = vmatmul.mubr.f32.gmra.mxu0 %v101
    %v192 = vpop.f32.mrf.mxu0
    %v193 = vadd.f32 %v124, %v192
    %v194 = vpop.f32.mrf.mxu0
    %195 = vmatprep.mubr.f32.mxu0 0.0
    %196 = vmatmul.mubr.f32.gmra.mxu0 %v102
    %v197 = vpop.f32.mrf.mxu0
    %v198 = vadd.f32 %v124, %v197
    %v199 = vpop.f32.mrf.mxu0
    %200 = vdwg.mxu0
    %v201 = vmul.f32 %v193, 0.01
    %v202 = vmul.f32 %v198, 0.01
    %v203 = vmax.f32 %v193, %v201
    %v204 = vmax.f32 %v198, %v202
    %v205 = vld [vmem:[#allocation7] sm:$0xff]
    %v206 = vld [vmem:[#allocation7 + $0x8] sm:$0xff]
    %v207 = vld [vmem:[#allocation7 + $0x10] sm:$0xff]
    %v208 = vld [vmem:[#allocation7 + $0x18] sm:$0xff]
    %v209 = vld [vmem:[#allocation7 + $0x20] sm:$0xff]
    %v210 = vld [vmem:[#allocation7 + $0x28] sm:$0xff]
    %v211 = vld [vmem:[#allocation7 + $0x30] sm:$0xff]
    %v212 = vld [vmem:[#allocation7 + $0x38] sm:$0xff]
    %v213 = vld [vmem:[#allocation7 + $0x40] sm:$0xff]
    %v214 = vld [vmem:[#allocation7 + $0x48] sm:$0xff]
    %v215 = vld [vmem:[#allocation7 + $0x50] sm:$0xff]
    %v216 = vld [vmem:[#allocation7 + $0x58] sm:$0xff]
    %v217 = vld [vmem:[#allocation7 + $0x60] sm:$0xff]
    %v218 = vld [vmem:[#allocation7 + $0x68] sm:$0xff]
    %v219 = vld [vmem:[#allocation7 + $0x70] sm:$0xff]
    %v220 = vld [vmem:[#allocation7 + $0x78] sm:$0xff]
    %v221 = vld [vmem:[%s4] sm:$0x1]
    %v223 = vlaneseq
    %v224 = vshrl.u32 %v223, 7
    %v225 = vsub.s32 0, %v224
    %v226 = vrot.slane %v221, %v225
    %228 = vmatprep.subr.mxu0 0.0
    %229 = vmatpush1.msra.mxu0 %v220
    %230 = vmatprep.subr.mxu0 0.0
    %231 = vmatpush1.msra.mxu0 %v219
    %232 = vmatprep.subr.mxu0 0.0
    %233 = vmatpush1.msra.mxu0 %v218
    %234 = vmatprep.subr.mxu0 0.0
    %235 = vmatpush1.msra.mxu0 %v217
    %236 = vmatprep.subr.mxu0 0.0
    %237 = vmatpush1.msra.mxu0 %v216
    %238 = vmatprep.subr.mxu0 0.0
    %239 = vmatpush1.msra.mxu0 %v215
    %240 = vmatprep.subr.mxu0 0.0
    %241 = vmatpush1.msra.mxu0 %v214
    %242 = vmatprep.subr.mxu0 0.0
    %243 = vmatpush1.msra.mxu0 %v213
    %244 = vmatprep.subr.mxu0 0.0
    %245 = vmatpush1.msra.mxu0 %v212
    %246 = vmatprep.subr.mxu0 0.0
    %247 = vmatpush1.msra.mxu0 %v211
    %248 = vmatprep.subr.mxu0 0.0
    %249 = vmatpush1.msra.mxu0 %v210
    %250 = vmatprep.subr.mxu0 0.0
    %251 = vmatpush1.msra.mxu0 %v209
    %252 = vmatprep.subr.mxu0 0.0
    %253 = vmatpush1.msra.mxu0 %v208
    %254 = vmatprep.subr.mxu0 0.0
    %255 = vmatpush1.msra.mxu0 %v207
    %256 = vmatprep.subr.mxu0 0.0
    %257 = vmatpush1.msra.mxu0 %v206
    %258 = vmatprep.subr.mxu0 0.0
    %259 = vmatpush1.msra.mxu0 %v205
    %260 = vmatprep.subr.mxu0 0.0
    %261 = vmatpush2.msra.mxu0 0.0
    %262 = vmatprep.subr.mxu0 0.0
    %263 = vmatpush2.msra.mxu0 0.0
    %264 = vmatprep.subr.mxu0 0.0
    %265 = vmatpush2.msra.mxu0 0.0
    %266 = vmatprep.subr.mxu0 0.0
    %267 = vmatpush2.msra.mxu0 0.0
    %268 = vmatprep.subr.mxu0 0.0
    %269 = vmatpush2.msra.mxu0 0.0
    %270 = vmatprep.subr.mxu0 0.0
    %271 = vmatpush2.msra.mxu0 0.0
    %272 = vmatprep.subr.mxu0 0.0
    %273 = vmatpush2.msra.mxu0 0.0
    %274 = vmatprep.subr.mxu0 0.0
    %275 = vmatpush2.msra.mxu0 0.0
    %276 = vmatprep.subr.mxu0 0.0
    %277 = vmatpush2.msra.mxu0 0.0
    %278 = vmatprep.subr.mxu0 0.0
    %279 = vmatpush2.msra.mxu0 0.0
    %280 = vmatprep.subr.mxu0 0.0
    %281 = vmatpush2.msra.mxu0 0.0
    %282 = vmatprep.subr.mxu0 0.0
    %283 = vmatpush2.msra.mxu0 0.0
    %284 = vmatprep.subr.mxu0 0.0
    %285 = vmatpush2.msra.mxu0 0.0
    %286 = vmatprep.subr.mxu0 0.0
    %287 = vmatpush2.msra.mxu0 0.0
    %288 = vmatprep.subr.mxu0 0.0
    %289 = vmatpush2.msra.mxu0 0.0
    %290 = vmatprep.subr.mxu0 0.0
    %291 = vmatpush2.msra.mxu0 0.0
    %292 = vmatprep.mubr.f32.mxu0 0.0
    %293 = vmatmul.mubr.f32.gmra.mxu0 %v203
    %v294 = vpop.f32.mrf.mxu0
    %v295 = vadd.f32 %v226, %v294
    %v296 = vpop.f32.mrf.mxu0
    %297 = vmatprep.mubr.f32.mxu0 0.0
    %298 = vmatmul.mubr.f32.gmra.mxu0 %v204
    %v299 = vpop.f32.mrf.mxu0
    %v300 = vadd.f32 %v226, %v299
    %v301 = vpop.f32.mrf.mxu0
    %302 = vdwg.mxu0
    %v303 = vmul.f32 %v295, 0.01
    %v304 = vmul.f32 %v300, 0.01
    %v305 = vmax.f32 %v295, %v303
    %v306 = vmax.f32 %v300, %v304
    %v307 = vld [vmem:[#allocation8] sm:$0xff]
    %v308 = vld [vmem:[#allocation8 + $0x8] sm:$0xff]
    %v309 = vld [vmem:[#allocation8 + $0x10] sm:$0xff]
    %v310 = vld [vmem:[#allocation8 + $0x18] sm:$0xff]
    %v311 = vld [vmem:[#allocation8 + $0x20] sm:$0xff]
    %v312 = vld [vmem:[#allocation8 + $0x28] sm:$0xff]
    %v313 = vld [vmem:[#allocation8 + $0x30] sm:$0xff]
    %v314 = vld [vmem:[#allocation8 + $0x38] sm:$0xff]
    %v315 = vld [vmem:[#allocation8 + $0x40] sm:$0xff]
    %v316 = vld [vmem:[#allocation8 + $0x48] sm:$0xff]
    %v317 = vld [vmem:[#allocation8 + $0x50] sm:$0xff]
    %v318 = vld [vmem:[#allocation8 + $0x58] sm:$0xff]
    %v319 = vld [vmem:[#allocation8 + $0x60] sm:$0xff]
    %v320 = vld [vmem:[#allocation8 + $0x68] sm:$0xff]
    %v321 = vld [vmem:[#allocation8 + $0x70] sm:$0xff]
    %v322 = vld [vmem:[#allocation8 + $0x78] sm:$0xff]
    %v323 = vld [vmem:[%s6] sm:$0x1]
    %v325 = vlaneseq
    %v326 = vshrl.u32 %v325, 7
    %v327 = vsub.s32 0, %v326
    %v328 = vrot.slane %v323, %v327
    %330 = vmatprep.subr.mxu0 0.0
    %331 = vmatpush1.msra.mxu0 %v322
    %332 = vmatprep.subr.mxu0 0.0
    %333 = vmatpush1.msra.mxu0 %v321
    %334 = vmatprep.subr.mxu0 0.0
    %335 = vmatpush1.msra.mxu0 %v320
    %336 = vmatprep.subr.mxu0 0.0
    %337 = vmatpush1.msra.mxu0 %v319
    %338 = vmatprep.subr.mxu0 0.0
    %339 = vmatpush1.msra.mxu0 %v318
    %340 = vmatprep.subr.mxu0 0.0
    %341 = vmatpush1.msra.mxu0 %v317
    %342 = vmatprep.subr.mxu0 0.0
    %343 = vmatpush1.msra.mxu0 %v316
    %344 = vmatprep.subr.mxu0 0.0
    %345 = vmatpush1.msra.mxu0 %v315
    %346 = vmatprep.subr.mxu0 0.0
    %347 = vmatpush1.msra.mxu0 %v314
    %348 = vmatprep.subr.mxu0 0.0
    %349 = vmatpush1.msra.mxu0 %v313
    %350 = vmatprep.subr.mxu0 0.0
    %351 = vmatpush1.msra.mxu0 %v312
    %352 = vmatprep.subr.mxu0 0.0
    %353 = vmatpush1.msra.mxu0 %v311
    %354 = vmatprep.subr.mxu0 0.0
    %355 = vmatpush1.msra.mxu0 %v310
    %356 = vmatprep.subr.mxu0 0.0
    %357 = vmatpush1.msra.mxu0 %v309
    %358 = vmatprep.subr.mxu0 0.0
    %359 = vmatpush1.msra.mxu0 %v308
    %360 = vmatprep.subr.mxu0 0.0
    %361 = vmatpush1.msra.mxu0 %v307
    %362 = vmatprep.subr.mxu0 0.0
    %363 = vmatpush2.msra.mxu0 0.0
    %364 = vmatprep.subr.mxu0 0.0
    %365 = vmatpush2.msra.mxu0 0.0
    %366 = vmatprep.subr.mxu0 0.0
    %367 = vmatpush2.msra.mxu0 0.0
    %368 = vmatprep.subr.mxu0 0.0
    %369 = vmatpush2.msra.mxu0 0.0
    %370 = vmatprep.subr.mxu0 0.0
    %371 = vmatpush2.msra.mxu0 0.0
    %372 = vmatprep.subr.mxu0 0.0
    %373 = vmatpush2.msra.mxu0 0.0
    %374 = vmatprep.subr.mxu0 0.0
    %375 = vmatpush2.msra.mxu0 0.0
    %376 = vmatprep.subr.mxu0 0.0
    %377 = vmatpush2.msra.mxu0 0.0
    %378 = vmatprep.subr.mxu0 0.0
    %379 = vmatpush2.msra.mxu0 0.0
    %380 = vmatprep.subr.mxu0 0.0
    %381 = vmatpush2.msra.mxu0 0.0
    %382 = vmatprep.subr.mxu0 0.0
    %383 = vmatpush2.msra.mxu0 0.0
    %384 = vmatprep.subr.mxu0 0.0
    %385 = vmatpush2.msra.mxu0 0.0
    %386 = vmatprep.subr.mxu0 0.0
    %387 = vmatpush2.msra.mxu0 0.0
    %388 = vmatprep.subr.mxu0 0.0
    %389 = vmatpush2.msra.mxu0 0.0
    %390 = vmatprep.subr.mxu0 0.0
    %391 = vmatpush2.msra.mxu0 0.0
    %392 = vmatprep.subr.mxu0 0.0
    %393 = vmatpush2.msra.mxu0 0.0
    %394 = vmatprep.mubr.f32.mxu0 0.0
    %395 = vmatmul.mubr.f32.gmra.mxu0 %v305
    %v396 = vpop.f32.mrf.mxu0
    %v397 = vadd.f32 %v328, %v396
    %v398 = vpop.f32.mrf.mxu0
    %399 = vmatprep.mubr.f32.mxu0 0.0
    %400 = vmatmul.mubr.f32.gmra.mxu0 %v306
    %v401 = vpop.f32.mrf.mxu0
    %v402 = vadd.f32 %v328, %v401
    %v403 = vpop.f32.mrf.mxu0
    %404 = vdwg.mxu0
    %v405 = vmul.f32 %v397, 0.01
    %v406 = vmul.f32 %v402, 0.01
    %v407 = vmax.f32 %v397, %v405
    %v408 = vmax.f32 %v402, %v406
    %v409 = vld [vmem:[#allocation10] sm:$0xff]
    %v410 = vld [vmem:[#allocation10 + $0x8] sm:$0xff]
    %v411 = vld [vmem:[#allocation10 + $0x10] sm:$0xff]
    %v412 = vld [vmem:[#allocation10 + $0x18] sm:$0xff]
    %v413 = vld [vmem:[#allocation10 + $0x20] sm:$0xff]
    %v414 = vld [vmem:[#allocation10 + $0x28] sm:$0xff]
    %v415 = vld [vmem:[#allocation10 + $0x30] sm:$0xff]
    %v416 = vld [vmem:[#allocation10 + $0x38] sm:$0xff]
    %v417 = vld [vmem:[#allocation10 + $0x40] sm:$0xff]
    %v418 = vld [vmem:[#allocation10 + $0x48] sm:$0xff]
    %v419 = vld [vmem:[#allocation10 + $0x50] sm:$0xff]
    %v420 = vld [vmem:[#allocation10 + $0x58] sm:$0xff]
    %v421 = vld [vmem:[#allocation10 + $0x60] sm:$0xff]
    %v422 = vld [vmem:[#allocation10 + $0x68] sm:$0xff]
    %v423 = vld [vmem:[#allocation10 + $0x70] sm:$0xff]
    %v424 = vld [vmem:[#allocation10 + $0x78] sm:$0xff]
    %v425 = vld [vmem:[%s8] sm:$0x1]
    %v427 = vlaneseq
    %v428 = vshrl.u32 %v427, 7
    %v429 = vsub.s32 0, %v428
    %v430 = vrot.slane %v425, %v429
    %432 = vmatprep.subr.mxu0 0.0
    %433 = vmatpush1.msra.mxu0 %v424
    %434 = vmatprep.subr.mxu0 0.0
    %435 = vmatpush1.msra.mxu0 %v423
    %436 = vmatprep.subr.mxu0 0.0
    %437 = vmatpush1.msra.mxu0 %v422
    %438 = vmatprep.subr.mxu0 0.0
    %439 = vmatpush1.msra.mxu0 %v421
    %440 = vmatprep.subr.mxu0 0.0
    %441 = vmatpush1.msra.mxu0 %v420
    %442 = vmatprep.subr.mxu0 0.0
    %443 = vmatpush1.msra.mxu0 %v419
    %444 = vmatprep.subr.mxu0 0.0
    %445 = vmatpush1.msra.mxu0 %v418
    %446 = vmatprep.subr.mxu0 0.0
    %447 = vmatpush1.msra.mxu0 %v417
    %448 = vmatprep.subr.mxu0 0.0
    %449 = vmatpush1.msra.mxu0 %v416
    %450 = vmatprep.subr.mxu0 0.0
    %451 = vmatpush1.msra.mxu0 %v415
    %452 = vmatprep.subr.mxu0 0.0
    %453 = vmatpush1.msra.mxu0 %v414
    %454 = vmatprep.subr.mxu0 0.0
    %455 = vmatpush1.msra.mxu0 %v413
    %456 = vmatprep.subr.mxu0 0.0
    %457 = vmatpush1.msra.mxu0 %v412
    %458 = vmatprep.subr.mxu0 0.0
    %459 = vmatpush1.msra.mxu0 %v411
    %460 = vmatprep.subr.mxu0 0.0
    %461 = vmatpush1.msra.mxu0 %v410
    %462 = vmatprep.subr.mxu0 0.0
    %463 = vmatpush1.msra.mxu0 %v409
    %464 = vmatprep.subr.mxu0 0.0
    %465 = vmatpush2.msra.mxu0 0.0
    %466 = vmatprep.subr.mxu0 0.0
    %467 = vmatpush2.msra.mxu0 0.0
    %468 = vmatprep.subr.mxu0 0.0
    %469 = vmatpush2.msra.mxu0 0.0
    %470 = vmatprep.subr.mxu0 0.0
    %471 = vmatpush2.msra.mxu0 0.0
    %472 = vmatprep.subr.mxu0 0.0
    %473 = vmatpush2.msra.mxu0 0.0
    %474 = vmatprep.subr.mxu0 0.0
    %475 = vmatpush2.msra.mxu0 0.0
    %476 = vmatprep.subr.mxu0 0.0
    %477 = vmatpush2.msra.mxu0 0.0
    %478 = vmatprep.subr.mxu0 0.0
    %479 = vmatpush2.msra.mxu0 0.0
    %480 = vmatprep.subr.mxu0 0.0
    %481 = vmatpush2.msra.mxu0 0.0
    %482 = vmatprep.subr.mxu0 0.0
    %483 = vmatpush2.msra.mxu0 0.0
    %484 = vmatprep.subr.mxu0 0.0
    %485 = vmatpush2.msra.mxu0 0.0
    %486 = vmatprep.subr.mxu0 0.0
    %487 = vmatpush2.msra.mxu0 0.0
    %488 = vmatprep.subr.mxu0 0.0
    %489 = vmatpush2.msra.mxu0 0.0
    %490 = vmatprep.subr.mxu0 0.0
    %491 = vmatpush2.msra.mxu0 0.0
    %492 = vmatprep.subr.mxu0 0.0
    %493 = vmatpush2.msra.mxu0 0.0
    %494 = vmatprep.subr.mxu0 0.0
    %495 = vmatpush2.msra.mxu0 0.0
    %496 = vmatprep.mubr.f32.mxu0 0.0
    %497 = vmatmul.mubr.f32.gmra.mxu0 %v407
    %v498 = vpop.f32.mrf.mxu0
    %v499 = vadd.f32 %v430, %v498
    %v500 = vpop.f32.mrf.mxu0
    %501 = vmatprep.mubr.f32.mxu0 0.0
    %502 = vmatmul.mubr.f32.gmra.mxu0 %v408
    %v503 = vpop.f32.mrf.mxu0
    %v504 = vadd.f32 %v430, %v503
    %v505 = vpop.f32.mrf.mxu0
    %506 = vdwg.mxu0
    %v507 = vmul.f32 %v499, 0.01
    %v508 = vmul.f32 %v504, 0.01
    %v509 = vmax.f32 %v499, %v507
    %v510 = vmax.f32 %v504, %v508
    %511 = vst [vmem:[#allocation11] sm:$0xff] %v509
    %512 = vst [vmem:[#allocation11 + $0x8] sm:$0xff] %v510
    // Predicated region
    $region58: #{tpu_custom_call.1} parent=1 // pred_check
      _
    $region59: #{tpu_custom_call.1} parent=1 // pred_check_branch
      %514 = sbr.rel (0) target = $region61
    $region60: #{tpu_custom_call.1} parent=1 // pred_region
      %s516 = ssub.s32 256, 256
      %517 = vsyncadd [#allocation4], %s516
      %s518 = sshll.u32 [#allocation11], 4
      %s519 = int_to_ptr.vmem [resolvable:$true] %s518
      %524 = dma.vmem_to_hbm [thread:$0]  %s519, 256, %s9, [#allocation4], 128, 128, 8
    $region61: #{tpu_custom_call.1} parent=1 // pred_fallthru
      _
    // Predicated region
    $region62: #{tpu_custom_call.1} parent=1 // pred_check
      _
    $region63: #{tpu_custom_call.1} parent=1 // pred_check_branch
      %526 = sbr.rel (0) target = $region65
    $region64: #{tpu_custom_call.1} parent=1 // pred_region
      %527 = dma.done [#allocation4], 256
    $region65: #{tpu_custom_call.1} parent=1 // pred_fallthru
      _
    %528 = vsyncpa [#allocation3], 1
    %529 = vsyncpa [#allocation6], 1
    %530 = vsyncpa [#allocation9], 1
    %531 = vsyncpa [#allocation4], 1

</llo_original>
